<compile_context>
chip_gen: v6e
topology: v6e:2x2x1
jax: 0.10.0
libtpu: 0.0.40
codegen_flags: <defaults>
</compile_context>

<pallas_src>
import numpy as np
import jax
import jax.numpy as jnp
from jax.experimental import pallas as pl
from jax.experimental.pallas import tpu as pltpu

_HALF_LOG_2PI = 0.9189385332046727  # 0.5 * log(2*pi)


def _round_up(n, m):
    return ((n + m - 1) // m) * m


def _choose_row_tile(n, d, num_levels):
    """Largest row tile whose double-buffered f32 working set (x in +
    L sampled_x blocks out) stays under ~16 MiB; small batches fall back to a
    single 128-row (padded) tile so the lane-dense log-prob blocks stay legal."""
    budget = 16 << 20
    for tm in (2048, 1024, 512, 256):
        if n >= tm and 2 * (1 + num_levels) * tm * d * 4 <= budget:
            return tm
    return 128


# ---------------------------------------------------------------------------
# Fused kernel: affine-flow stand-in + pretrained stand-in + log_probq
# correction, all ladder levels unrolled per row tile.
# grid = (N_pad // TM,); scalar-prefetch arg = log|det| + D*0.5*log(2*pi).
# ---------------------------------------------------------------------------
def fused_kernel(ldp_ref,                       # SMEM (L,) scalar prefetch
                 x_ref, scale_ref, shift_ref,   # VMEM inputs
                 w_ref, b_ref,
                 sx_ref, lp_ref):               # VMEM outputs
    x = x_ref[...]                              # (TM, D)
    d = x.shape[-1]
    w = w_ref[...]                              # (D, D)  resident (constant block index)
    b = b_ref[...]                              # (1, D)
    num_levels = scale_ref.shape[0]
    lz_const = d * _HALF_LOG_2PI

    # logN(x;0,I) sans constants: shared by every ladder level, computed once
    # per row tile.  Lane-axis reduce -> (TM,) lane-dense vector.
    xsq = -0.5 * jnp.sum(x * x, axis=-1)        # (TM,)

    # Ladder levels unrolled so x is streamed from HBM only once per tile.
    for l in range(num_levels):
        scale = scale_ref[l]                    # (1, D)
        shift = shift_ref[l]                    # (1, D)

        # affine flow stand-in (elementwise, VPU)
        z = x * scale + shift                   # (TM, D)

        # log q(x) = logN(x;0,I) - log|det|  (constants folded host-side into ldp)
        lq = xsq - ldp_ref[l]                   # (TM,)
        # log N(z; 0, I)
        lz = -0.5 * jnp.sum(z * z, axis=-1) - lz_const

        # pretrained stand-in: tanh(z @ W + b)  (MXU matmul f32 acc, EUP tanh)
        # TODO(synk): for large D, cast z/W to bf16 for the dot (keep f32
        # accumulation) and mark W/b pipeline_mode=pl.Buffered(1); at D=128 the
        # kernel is HBM-bound so this is left in full f32.
        h = jnp.dot(z, w, preferred_element_type=jnp.float32) + b
        s = jnp.tanh(h)                         # (TM, D)
        sx_ref[l] = s

        # pretrained-flow correction: log_q - logN(s;0,I).  Scalar outputs are
        # stored lane-dense (N on the lane axis) to avoid masked vst.msk.
        lpt = -0.5 * jnp.sum(s * s, axis=-1) - lz_const
        lp_ref[0, l, :] = lq - lpt              # corrected log_probq
        lp_ref[1, l, :] = lz                    # log_probz


class CanModel:
    """JAX/Pallas mirror of the torch CanModel (bound_q=None configuration)."""

    def __init__(self, idx_ladder, data_shape, key):
        self.idx_ladder = list(idx_ladder)
        self.data_shape = data_shape
        L, D = len(self.idx_ladder), data_shape
        k1, k2, k3, k4 = jax.random.split(key, 4)
        # deterministic synthetic parameters for the external `model` (affine flow / level)
        self.scale = jnp.exp(0.1 * jax.random.normal(k1, (L, 1, D), jnp.float32))
        self.shift = 0.1 * jax.random.normal(k2, (L, 1, D), jnp.float32)
        # deterministic synthetic parameters for `pretrained` (linear + tanh transform)
        self.w = (jax.random.normal(k3, (D, D), jnp.float32) / jnp.sqrt(D)).astype(jnp.float32)
        self.b = 0.01 * jax.random.normal(k4, (1, D), jnp.float32)

    def forward(self, num_samples, key):
        L, D, N = len(self.idx_ladder), self.data_shape, num_samples

        # base_dist.sample(num_samples)  (glue: plain JAX RNG, deterministic)
        x = jax.random.normal(key, (N, D), jnp.float32)

        TM = _choose_row_tile(N, D, L)
        N_pad = _round_up(N, TM)
        if N_pad != N:
            # pad to a whole number of row tiles (zero rows computed, discarded)
            # instead of degrading to tiny or unpipelined blocks.
            x = jnp.pad(x, ((0, N_pad - N), (0, 0)))
        NT = N_pad // TM

        # parameter-only work hoisted out of the kernel:
        # per-level log|det| + D * 0.5*log(2*pi), prefetched into SMEM.
        ldp = (jnp.sum(jnp.log(self.scale), axis=(1, 2))
               + jnp.float32(D * _HALF_LOG_2PI)).astype(jnp.float32)  # (L,)

        sampled_x, lp = pl.pallas_call(
            fused_kernel,
            grid_spec=pltpu.PrefetchScalarGridSpec(
                num_scalar_prefetch=1,
                grid=(NT,),
                in_specs=[
                    pl.BlockSpec((TM, D), lambda t, s: (t, 0)),        # x (read once / tile)
                    pl.BlockSpec((L, 1, D), lambda t, s: (0, 0, 0)),   # scale (resident)
                    pl.BlockSpec((L, 1, D), lambda t, s: (0, 0, 0)),   # shift (resident)
                    pl.BlockSpec((D, D), lambda t, s: (0, 0)),         # W (resident)
                    pl.BlockSpec((1, D), lambda t, s: (0, 0)),         # b (resident)
                ],
                out_specs=[
                    pl.BlockSpec((L, TM, D), lambda t, s: (0, t, 0)),  # sampled_x (all levels)
                    pl.BlockSpec((2, L, TM), lambda t, s: (0, 0, t)),  # [log_q_adj; log_z] lane-dense
                ],
            ),
            out_shape=(
                jax.ShapeDtypeStruct((L, N_pad, D), jnp.float32),
                jax.ShapeDtypeStruct((2, L, N_pad), jnp.float32),
            ),
            compiler_params=pltpu.CompilerParams(
                dimension_semantics=("parallel",),
                vmem_limit_bytes=48 * 1024 * 1024),
        )(ldp, x, self.scale, self.shift, self.w, self.b)

        # log_probp_ls = chunk(log(3 * ones(L*N) / (5 * 4**6)), L)
        logp_const = float(np.log(3.0 / (5.0 * 4.0 ** 6)))
        log_probp_ls = [jnp.full((N,), logp_const, jnp.float32) for _ in range(L)]
        # TODO(synk): the optional `bound_q` branch is omitted (bound_q is None here).
        # TODO(synk): sampled_x could be emitted as bf16 (dominant HBM stream)
        # if downstream consumers tolerate it; kept f32 to match torch semantics.

        sampled_x_ls = [sampled_x[l, :N] for l in range(L)]       # torch.chunk along dim 0
        log_probq_ls = [lp[0, l, :N] for l in range(L)]
        log_probz_ls = [lp[1, l, :N] for l in range(L)]
        return sampled_x_ls, log_probq_ls, log_probz_ls, log_probp_ls


if __name__ == "__main__":
    key = jax.random.PRNGKey(0)
    param_key, sample_key = jax.random.split(key)

    # small shapes: 2 ladder levels, 8 samples, feature dim 128 (lane-aligned)
    L, D, N = 2, 128, 8
    can = CanModel(idx_ladder=[1, 2], data_shape=D, key=param_key)
    sampled_x_ls, log_probq_ls, log_probz_ls, log_probp_ls = can.forward(
        num_samples=N, key=sample_key)
    jax.block_until_ready((sampled_x_ls, log_probq_ls, log_probz_ls, log_probp_ls))

    # pure-JAX reference check (loose tolerances: MXU f32 emulation path)
    x = jax.random.normal(sample_key, (N, D), jnp.float32)
    for l in range(L):
        z = x * can.scale[l] + can.shift[l]
        s = jnp.tanh(z @ can.w + can.b)
        lq = (-0.5 * jnp.sum(x * x, -1) - D * _HALF_LOG_2PI
              - jnp.sum(jnp.log(can.scale[l])))
        lpt = -0.5 * jnp.sum(s * s, -1) - D * _HALF_LOG_2PI
        lz = -0.5 * jnp.sum(z * z, -1) - D * _HALF_LOG_2PI
        np.testing.assert_allclose(np.asarray(sampled_x_ls[l]), np.asarray(s),
                                   rtol=1e-2, atol=1e-1)
        np.testing.assert_allclose(np.asarray(log_probq_ls[l]), np.asarray(lq - lpt),
                                   rtol=1e-2, atol=1e-1)
        np.testing.assert_allclose(np.asarray(log_probz_ls[l]), np.asarray(lz),
                                   rtol=1e-2, atol=1e-1)

    # mirror `temp = sampled_x_ls[-1].detach().cpu().numpy()`
    _temp = np.asarray(sampled_x_ls[-1])
    print("KERNEL_OK")
</pallas_src>

<mosaic_0001>
module attributes {stable_mosaic.version = 11 : i64} {
  func.func @fused_kernel(%arg0: i32, %arg1: memref<2xf32, #tpu.memory_space<smem>>, %arg2: memref<128x128xf32, #tpu.memory_space<vmem>>, %arg3: memref<2x1x128xf32, #tpu.memory_space<vmem>>, %arg4: memref<2x1x128xf32, #tpu.memory_space<vmem>>, %arg5: memref<128x128xf32, #tpu.memory_space<vmem>>, %arg6: memref<1x128xf32, #tpu.memory_space<vmem>>, %arg7: memref<2x128x128xf32, #tpu.memory_space<vmem>>, %arg8: memref<2x2x128xf32, #tpu.memory_space<vmem>>) attributes {dimension_semantics = [#tpu.dimension_semantics<parallel>], iteration_bounds = array<i64: 1>, scalar_prefetch = 1 : i64, scratch_operands = 0 : i64, tpu.core_type = #tpu.core_type<tc>, window_params = [{transform_indices = @transform_0, window_bounds = array<i64: 128, 128>}, {pipeline_mode = #tpu.pipeline_mode<synchronous>, transform_indices = @transform_1, window_bounds = array<i64: 2, 1, 128>}, {pipeline_mode = #tpu.pipeline_mode<synchronous>, transform_indices = @transform_2, window_bounds = array<i64: 2, 1, 128>}, {pipeline_mode = #tpu.pipeline_mode<synchronous>, transform_indices = @transform_3, window_bounds = array<i64: 128, 128>}, {pipeline_mode = #tpu.pipeline_mode<synchronous>, transform_indices = @transform_4, window_bounds = array<i64: 1, 128>}, {transform_indices = @transform_5, window_bounds = array<i64: 2, 128, 128>}, {transform_indices = @transform_6, window_bounds = array<i64: 2, 2, 128>}]} {
    %c0 = arith.constant 0 : index
    %c0_0 = arith.constant 0 : index
    %0 = vector.load %arg2[%c0, %c0_0] : memref<128x128xf32, #tpu.memory_space<vmem>>, vector<128x128xf32>
    %c0_1 = arith.constant 0 : index
    %c0_2 = arith.constant 0 : index
    %1 = vector.load %arg5[%c0_1, %c0_2] : memref<128x128xf32, #tpu.memory_space<vmem>>, vector<128x128xf32>
    %c0_3 = arith.constant 0 : index
    %c0_4 = arith.constant 0 : index
    %2 = vector.load %arg6[%c0_3, %c0_4] : memref<1x128xf32, #tpu.memory_space<vmem>>, vector<1x128xf32>
    %3 = arith.mulf %0, %0 : vector<128x128xf32>
    %cst = arith.constant dense<0.000000e+00> : vector<128xf32>
    %4 = vector.multi_reduction <add>, %3, %cst [1] : vector<128x128xf32> to vector<128xf32>
    %cst_5 = arith.constant -5.000000e-01 : f32
    %5 = vector.broadcast %cst_5 : f32 to vector<128xf32>
    %6 = arith.mulf %5, %4 : vector<128xf32>
    %c0_6 = arith.constant 0 : index
    %c0_7 = arith.constant 0 : index
    %c0_8 = arith.constant 0 : index
    %7 = vector.load %arg3[%c0_6, %c0_7, %c0_8] : memref<2x1x128xf32, #tpu.memory_space<vmem>>, vector<1x1x128xf32>
    %8 = vector.shape_cast %7 : vector<1x1x128xf32> to vector<1x128xf32>
    %c0_9 = arith.constant 0 : index
    %c0_10 = arith.constant 0 : index
    %c0_11 = arith.constant 0 : index
    %9 = vector.load %arg4[%c0_9, %c0_10, %c0_11] : memref<2x1x128xf32, #tpu.memory_space<vmem>>, vector<1x1x128xf32>
    %10 = vector.shape_cast %9 : vector<1x1x128xf32> to vector<1x128xf32>
    %11 = vector.broadcast %8 : vector<1x128xf32> to vector<128x128xf32>
    %12 = arith.mulf %0, %11 : vector<128x128xf32>
    %13 = vector.broadcast %10 : vector<1x128xf32> to vector<128x128xf32>
    %14 = arith.addf %12, %13 : vector<128x128xf32>
    %c0_12 = arith.constant 0 : index
    %15 = memref.load %arg1[%c0_12] : memref<2xf32, #tpu.memory_space<smem>>
    %16 = vector.broadcast %15 : f32 to vector<128xf32>
    %17 = arith.subf %6, %16 : vector<128xf32>
    %18 = arith.mulf %14, %14 : vector<128x128xf32>
    %cst_13 = arith.constant dense<0.000000e+00> : vector<128xf32>
    %19 = vector.multi_reduction <add>, %18, %cst_13 [1] : vector<128x128xf32> to vector<128xf32>
    %cst_14 = arith.constant -5.000000e-01 : f32
    %20 = vector.broadcast %cst_14 : f32 to vector<128xf32>
    %21 = arith.mulf %20, %19 : vector<128xf32>
    %cst_15 = arith.constant 117.62413 : f32
    %22 = vector.broadcast %cst_15 : f32 to vector<128xf32>
    %23 = arith.subf %21, %22 : vector<128xf32>
    %cst_16 = arith.constant dense<0.000000e+00> : vector<128x128xf32>
    %24 = tpu.matmul %14, %1, %cst_16 {dimension_numbers = #tpu.dot_dimension_numbers<[1], [0], [0], [1], [0, 0, 1, 1], [], []>} : vector<128x128xf32>, vector<128x128xf32>, vector<128x128xf32> -> vector<128x128xf32>
    %25 = vector.broadcast %2 : vector<1x128xf32> to vector<128x128xf32>
    %26 = arith.addf %24, %25 : vector<128x128xf32>
    %27 = math.tanh %26 : vector<128x128xf32>
    %c0_17 = arith.constant 0 : index
    %c0_18 = arith.constant 0 : index
    %c0_19 = arith.constant 0 : index
    %28 = vector.load %arg7[%c0_17, %c0_18, %c0_19] : memref<2x128x128xf32, #tpu.memory_space<vmem>>, vector<1x128x128xf32>
    %29 = vector.shape_cast %28 : vector<1x128x128xf32> to vector<128x128xf32>
    %30 = vector.shape_cast %27 : vector<128x128xf32> to vector<1x128x128xf32>
    tpu.vector_store %arg7[%c0_17, %c0_18, %c0_19], %30 {strides = array<i32>} : memref<2x128x128xf32, #tpu.memory_space<vmem>>, vector<1x128x128xf32>,
    %31 = arith.mulf %27, %27 : vector<128x128xf32>
    %cst_20 = arith.constant dense<0.000000e+00> : vector<128xf32>
    %32 = vector.multi_reduction <add>, %31, %cst_20 [1] : vector<128x128xf32> to vector<128xf32>
    %cst_21 = arith.constant -5.000000e-01 : f32
    %33 = vector.broadcast %cst_21 : f32 to vector<128xf32>
    %34 = arith.mulf %33, %32 : vector<128xf32>
    %cst_22 = arith.constant 117.62413 : f32
    %35 = vector.broadcast %cst_22 : f32 to vector<128xf32>
    %36 = arith.subf %34, %35 : vector<128xf32>
    %37 = arith.subf %17, %36 : vector<128xf32>
    %c0_23 = arith.constant 0 : index
    %c0_24 = arith.constant 0 : index
    %c0_25 = arith.constant 0 : index
    %38 = vector.load %arg8[%c0_23, %c0_24, %c0_25] : memref<2x2x128xf32, #tpu.memory_space<vmem>>, vector<1x1x128xf32>
    %39 = vector.shape_cast %38 : vector<1x1x128xf32> to vector<128xf32>
    %40 = vector.shape_cast %37 : vector<128xf32> to vector<1x1x128xf32>
    tpu.vector_store %arg8[%c0_23, %c0_24, %c0_25], %40 {strides = array<i32>} : memref<2x2x128xf32, #tpu.memory_space<vmem>>, vector<1x1x128xf32>,
    %c1 = arith.constant 1 : index
    %c0_26 = arith.constant 0 : index
    %c0_27 = arith.constant 0 : index
    %41 = vector.load %arg8[%c1, %c0_26, %c0_27] : memref<2x2x128xf32, #tpu.memory_space<vmem>>, vector<1x1x128xf32>
    %42 = vector.shape_cast %41 : vector<1x1x128xf32> to vector<128xf32>
    %43 = vector.shape_cast %23 : vector<128xf32> to vector<1x1x128xf32>
    tpu.vector_store %arg8[%c1, %c0_26, %c0_27], %43 {strides = array<i32>} : memref<2x2x128xf32, #tpu.memory_space<vmem>>, vector<1x1x128xf32>,
    %c1_28 = arith.constant 1 : index
    %c0_29 = arith.constant 0 : index
    %c0_30 = arith.constant 0 : index
    %44 = vector.load %arg3[%c1_28, %c0_29, %c0_30] : memref<2x1x128xf32, #tpu.memory_space<vmem>>, vector<1x1x128xf32>
    %45 = vector.shape_cast %44 : vector<1x1x128xf32> to vector<1x128xf32>
    %c1_31 = arith.constant 1 : index
    %c0_32 = arith.constant 0 : index
    %c0_33 = arith.constant 0 : index
    %46 = vector.load %arg4[%c1_31, %c0_32, %c0_33] : memref<2x1x128xf32, #tpu.memory_space<vmem>>, vector<1x1x128xf32>
    %47 = vector.shape_cast %46 : vector<1x1x128xf32> to vector<1x128xf32>
    %48 = vector.broadcast %45 : vector<1x128xf32> to vector<128x128xf32>
    %49 = arith.mulf %0, %48 : vector<128x128xf32>
    %50 = vector.broadcast %47 : vector<1x128xf32> to vector<128x128xf32>
    %51 = arith.addf %49, %50 : vector<128x128xf32>
    %c1_34 = arith.constant 1 : index
    %52 = memref.load %arg1[%c1_34] : memref<2xf32, #tpu.memory_space<smem>>
    %53 = vector.broadcast %52 : f32 to vector<128xf32>
    %54 = arith.subf %6, %53 : vector<128xf32>
    %55 = arith.mulf %51, %51 : vector<128x128xf32>
    %cst_35 = arith.constant dense<0.000000e+00> : vector<128xf32>
    %56 = vector.multi_reduction <add>, %55, %cst_35 [1] : vector<128x128xf32> to vector<128xf32>
    %cst_36 = arith.constant -5.000000e-01 : f32
    %57 = vector.broadcast %cst_36 : f32 to vector<128xf32>
    %58 = arith.mulf %57, %56 : vector<128xf32>
    %cst_37 = arith.constant 117.62413 : f32
    %59 = vector.broadcast %cst_37 : f32 to vector<128xf32>
    %60 = arith.subf %58, %59 : vector<128xf32>
    %cst_38 = arith.constant dense<0.000000e+00> : vector<128x128xf32>
    %61 = tpu.matmul %51, %1, %cst_38 {dimension_numbers = #tpu.dot_dimension_numbers<[1], [0], [0], [1], [0, 0, 1, 1], [], []>} : vector<128x128xf32>, vector<128x128xf32>, vector<128x128xf32> -> vector<128x128xf32>
    %62 = vector.broadcast %2 : vector<1x128xf32> to vector<128x128xf32>
    %63 = arith.addf %61, %62 : vector<128x128xf32>
    %64 = math.tanh %63 : vector<128x128xf32>
    %c1_39 = arith.constant 1 : index
    %c0_40 = arith.constant 0 : index
    %c0_41 = arith.constant 0 : index
    %65 = vector.load %arg7[%c1_39, %c0_40, %c0_41] : memref<2x128x128xf32, #tpu.memory_space<vmem>>, vector<1x128x128xf32>
    %66 = vector.shape_cast %65 : vector<1x128x128xf32> to vector<128x128xf32>
    %67 = vector.shape_cast %64 : vector<128x128xf32> to vector<1x128x128xf32>
    tpu.vector_store %arg7[%c1_39, %c0_40, %c0_41], %67 {strides = array<i32>} : memref<2x128x128xf32, #tpu.memory_space<vmem>>, vector<1x128x128xf32>,
    %68 = arith.mulf %64, %64 : vector<128x128xf32>
    %cst_42 = arith.constant dense<0.000000e+00> : vector<128xf32>
    %69 = vector.multi_reduction <add>, %68, %cst_42 [1] : vector<128x128xf32> to vector<128xf32>
    %cst_43 = arith.constant -5.000000e-01 : f32
    %70 = vector.broadcast %cst_43 : f32 to vector<128xf32>
    %71 = arith.mulf %70, %69 : vector<128xf32>
    %cst_44 = arith.constant 117.62413 : f32
    %72 = vector.broadcast %cst_44 : f32 to vector<128xf32>
    %73 = arith.subf %71, %72 : vector<128xf32>
    %74 = arith.subf %54, %73 : vector<128xf32>
    %c0_45 = arith.constant 0 : index
    %c1_46 = arith.constant 1 : index
    %c0_47 = arith.constant 0 : index
    %75 = vector.load %arg8[%c0_45, %c1_46, %c0_47] : memref<2x2x128xf32, #tpu.memory_space<vmem>>, vector<1x1x128xf32>
    %76 = vector.shape_cast %75 : vector<1x1x128xf32> to vector<128xf32>
    %77 = vector.shape_cast %74 : vector<128xf32> to vector<1x1x128xf32>
    tpu.vector_store %arg8[%c0_45, %c1_46, %c0_47], %77 {strides = array<i32>} : memref<2x2x128xf32, #tpu.memory_space<vmem>>, vector<1x1x128xf32>,
    %c1_48 = arith.constant 1 : index
    %c1_49 = arith.constant 1 : index
    %c0_50 = arith.constant 0 : index
    %78 = vector.load %arg8[%c1_48, %c1_49, %c0_50] : memref<2x2x128xf32, #tpu.memory_space<vmem>>, vector<1x1x128xf32>
    %79 = vector.shape_cast %78 : vector<1x1x128xf32> to vector<128xf32>
    %80 = vector.shape_cast %60 : vector<128xf32> to vector<1x1x128xf32>
    tpu.vector_store %arg8[%c1_48, %c1_49, %c0_50], %80 {strides = array<i32>} : memref<2x2x128xf32, #tpu.memory_space<vmem>>, vector<1x1x128xf32>,
    return
  }
  func.func @transform_0(%arg0: i32, %arg1: memref<2xf32, #tpu.memory_space<smem>>) -> (i32, i32) {
    %c0_i32 = arith.constant 0 : i32
    %c0_i32_0 = arith.constant 0 : i32
    return %arg0, %c0_i32 : i32, i32
  }
  func.func @transform_1(%arg0: i32, %arg1: memref<2xf32, #tpu.memory_space<smem>>) -> (i32, i32, i32) {
    %c0_i32 = arith.constant 0 : i32
    %c0_i32_0 = arith.constant 0 : i32
    %c0_i32_1 = arith.constant 0 : i32
    %c0_i32_2 = arith.constant 0 : i32
    return %c0_i32, %c0_i32_0, %c0_i32_1 : i32, i32, i32
  }
  func.func @transform_2(%arg0: i32, %arg1: memref<2xf32, #tpu.memory_space<smem>>) -> (i32, i32, i32) {
    %c0_i32 = arith.constant 0 : i32
    %c0_i32_0 = arith.constant 0 : i32
    %c0_i32_1 = arith.constant 0 : i32
    %c0_i32_2 = arith.constant 0 : i32
    return %c0_i32, %c0_i32_0, %c0_i32_1 : i32, i32, i32
  }
  func.func @transform_3(%arg0: i32, %arg1: memref<2xf32, #tpu.memory_space<smem>>) -> (i32, i32) {
    %c0_i32 = arith.constant 0 : i32
    %c0_i32_0 = arith.constant 0 : i32
    %c0_i32_1 = arith.constant 0 : i32
    return %c0_i32, %c0_i32_0 : i32, i32
  }
  func.func @transform_4(%arg0: i32, %arg1: memref<2xf32, #tpu.memory_space<smem>>) -> (i32, i32) {
    %c0_i32 = arith.constant 0 : i32
    %c0_i32_0 = arith.constant 0 : i32
    %c0_i32_1 = arith.constant 0 : i32
    return %c0_i32, %c0_i32_0 : i32, i32
  }
  func.func @transform_5(%arg0: i32, %arg1: memref<2xf32, #tpu.memory_space<smem>>) -> (i32, i32, i32) {
    %c0_i32 = arith.constant 0 : i32
    %c0_i32_0 = arith.constant 0 : i32
    %c0_i32_1 = arith.constant 0 : i32
    return %c0_i32, %arg0, %c0_i32_0 : i32, i32, i32
  }
  func.func @transform_6(%arg0: i32, %arg1: memref<2xf32, #tpu.memory_space<smem>>) -> (i32, i32, i32) {
    %c0_i32 = arith.constant 0 : i32
    %c0_i32_0 = arith.constant 0 : i32
    %c0_i32_1 = arith.constant 0 : i32
    return %c0_i32, %c0_i32_0, %arg0 : i32, i32, i32
  }
}

</mosaic_0001>

<llo_original>
// kernel: tpu_custom_call.1
$region0: #{tpu_custom_call.1}
  #allocation0 [shape = 'u32[]', space=smem, size = 0x4, offset = 0x4, fixed_abs, tag = 'smem constant byte address 0x4 - core index']
  #allocation1 [shape = 'u32[144,128]{1,0:T(1,128)}', space=vmem, size = 0x12000, scoped, tag = 'internal scratch']
  #allocation2 [shape = 's32[1]{0}', space=sflag, size = 0x4, scoped, tag = 'scoped memory for tpu_custom_call.1']
  #allocation3 [shape = 'u8[512]{0}', space=smem, size = 0x200, scoped, tag = 'prefetched SMEM operand 0']
  %s0 = inlined_call_operand.hbm [shape: f32[2], index: 0, kind: input, shape index: {}]
  %s1 = inlined_call_operand.hbm [shape: f32[128,128], index: 1, kind: input, shape index: {}]
  %s2 = inlined_call_operand.vmem [shape: f32[2,1,128], index: 2, kind: input, shape index: {}]
  %s3 = inlined_call_operand.vmem [shape: f32[2,1,128], index: 3, kind: input, shape index: {}]
  %s4 = inlined_call_operand.hbm [shape: f32[128,128], index: 4, kind: input, shape index: {}]
  %s5 = inlined_call_operand.vmem [shape: f32[1,128], index: 5, kind: input, shape index: {}]
  %s6 = inlined_call_operand.hbm [shape: f32[2,128,128], index: 6, kind: output, shape index: {0}]
  %s7 = inlined_call_operand.hbm [shape: f32[2,2,128], index: 7, kind: output, shape index: {1}]
  %8 = xla_tuple %s6, %s7
  %s9 = sld [smem:[#allocation0]]
  $region46: #{tpu_custom_call.1} parent=0
    _
  %s11 = ssub.s32 1, %s9
  %s12 = scalar_select 0, %s11, %s9
  %14 = dma.hbm_to_smem %s0, 16, [#allocation3], [#allocation2]
  %15 = dma.done [#allocation2], 16
  %16 = sfence
  $region1: #{tpu_custom_call.1} parent=0
    #allocation4 [shape = 'u8[65536]{0}', space=vmem, size = 0x10000, scoped, tag = 'input window, operand 1, single buffered']
    #allocation5 [shape = 's32[1]{0}', space=sflag, size = 0x4, scoped, tag = 'scoped memory for tpu_custom_call.1']
    #allocation6 [shape = 's32[1]{0}', space=sflag, size = 0x4, scoped, tag = 'scoped memory for tpu_custom_call.1']
    #allocation7 [shape = 'u8[65536]{0}', space=vmem, size = 0x10000, scoped, tag = 'input window, operand 4, single buffered']
    #allocation8 [shape = 's32[1]{0}', space=sflag, size = 0x4, scoped, tag = 'scoped memory for tpu_custom_call.1']
    #allocation9 [shape = 'u8[131072]{0}', space=vmem, size = 0x20000, scoped, tag = 'output window, operand 0, single buffered']
    #allocation10 [shape = 'u8[2048]{0}', space=vmem, size = 0x800, scoped, tag = 'output window, operand 1, single buffered']
    #allocation11 [shape = 's32[1]{0}', space=sflag, size = 0x4, scoped, tag = 'scoped memory for tpu_custom_call.1']
    %17 = vsyncpa [#allocation5], 0
    %18 = vsyncpa [#allocation8], 0
    %19 = vsyncpa [#allocation6], 0
    %20 = vsyncpa [#allocation11], 0
    // Predicated region
    $region2: #{tpu_custom_call.1} parent=1 // pred_check
      _
    $region3: #{tpu_custom_call.1} parent=1 // pred_check_branch
      %22 = sbr.rel (0) target = $region5
    $region4: #{tpu_custom_call.1} parent=1 // pred_region
      %s24 = ssub.s32 2048, 2048
      %25 = vsyncadd [#allocation5], %s24
      %s26 = sshll.u32 [#allocation4], 4
      %s27 = int_to_ptr.vmem [resolvable:$true] %s26
      %32 = dma.hbm_to_vmem [thread:$0]  %s1, 2048, %s27, [#allocation5], 128, 128, 8
    $region5: #{tpu_custom_call.1} parent=1 // pred_fallthru
      _
    // Predicated region
    $region6: #{tpu_custom_call.1} parent=1 // pred_check
      _
    $region7: #{tpu_custom_call.1} parent=1 // pred_check_branch
      %34 = sbr.rel (0) target = $region9
    $region8: #{tpu_custom_call.1} parent=1 // pred_region
      _
    $region9: #{tpu_custom_call.1} parent=1 // pred_fallthru
      _
    // Predicated region
    $region10: #{tpu_custom_call.1} parent=1 // pred_check
      _
    $region11: #{tpu_custom_call.1} parent=1 // pred_check_branch
      %36 = sbr.rel (0) target = $region13
    $region12: #{tpu_custom_call.1} parent=1 // pred_region
      _
    $region13: #{tpu_custom_call.1} parent=1 // pred_fallthru
      _
    // Predicated region
    $region14: #{tpu_custom_call.1} parent=1 // pred_check
      _
    $region15: #{tpu_custom_call.1} parent=1 // pred_check_branch
      %38 = sbr.rel (0) target = $region17
    $region16: #{tpu_custom_call.1} parent=1 // pred_region
      %s40 = ssub.s32 2048, 2048
      %41 = vsyncadd [#allocation8], %s40
      %s42 = sshll.u32 [#allocation7], 4
      %s43 = int_to_ptr.vmem [resolvable:$true] %s42
      %48 = dma.hbm_to_vmem [thread:$0]  %s4, 2048, %s43, [#allocation8], 128, 128, 8
    $region17: #{tpu_custom_call.1} parent=1 // pred_fallthru
      _
    // Predicated region
    $region18: #{tpu_custom_call.1} parent=1 // pred_check
      _
    $region19: #{tpu_custom_call.1} parent=1 // pred_check_branch
      %50 = sbr.rel (0) target = $region21
    $region20: #{tpu_custom_call.1} parent=1 // pred_region
      _
    $region21: #{tpu_custom_call.1} parent=1 // pred_fallthru
      _
    // Predicated region
    $region22: #{tpu_custom_call.1} parent=1 // pred_check
      _
    $region23: #{tpu_custom_call.1} parent=1 // pred_check_branch
      %52 = sbr.rel (0) target = $region25
    $region24: #{tpu_custom_call.1} parent=1 // pred_region
      %53 = dma.done [#allocation5], 2048
    $region25: #{tpu_custom_call.1} parent=1 // pred_fallthru
      _
    // Predicated region
    $region26: #{tpu_custom_call.1} parent=1 // pred_check
      _
    $region27: #{tpu_custom_call.1} parent=1 // pred_check_branch
      %55 = sbr.rel (0) target = $region29
    $region28: #{tpu_custom_call.1} parent=1 // pred_region
      %56 = dma.done [#allocation8], 2048
    $region29: #{tpu_custom_call.1} parent=1 // pred_fallthru
      _
    %v57 = vld [vmem:[#allocation4] sm:$0xff]
    %v58 = vld [vmem:[#allocation4 + $0x8] sm:$0xff]
    %v59 = vld [vmem:[#allocation4 + $0x10] sm:$0xff]
    %v60 = vld [vmem:[#allocation4 + $0x18] sm:$0xff]
    %v61 = vld [vmem:[#allocation4 + $0x20] sm:$0xff]
    %v62 = vld [vmem:[#allocation4 + $0x28] sm:$0xff]
    %v63 = vld [vmem:[#allocation4 + $0x30] sm:$0xff]
    %v64 = vld [vmem:[#allocation4 + $0x38] sm:$0xff]
    %v65 = vld [vmem:[#allocation4 + $0x40] sm:$0xff]
    %v66 = vld [vmem:[#allocation4 + $0x48] sm:$0xff]
    %v67 = vld [vmem:[#allocation4 + $0x50] sm:$0xff]
    %v68 = vld [vmem:[#allocation4 + $0x58] sm:$0xff]
    %v69 = vld [vmem:[#allocation4 + $0x60] sm:$0xff]
    %v70 = vld [vmem:[#allocation4 + $0x68] sm:$0xff]
    %v71 = vld [vmem:[#allocation4 + $0x70] sm:$0xff]
    %v72 = vld [vmem:[#allocation4 + $0x78] sm:$0xff]
    %v73 = vld [vmem:[#allocation7] sm:$0xff]
    %v74 = vld [vmem:[#allocation7 + $0x8] sm:$0xff]
    %v75 = vld [vmem:[#allocation7 + $0x10] sm:$0xff]
    %v76 = vld [vmem:[#allocation7 + $0x18] sm:$0xff]
    %v77 = vld [vmem:[#allocation7 + $0x20] sm:$0xff]
    %v78 = vld [vmem:[#allocation7 + $0x28] sm:$0xff]
    %v79 = vld [vmem:[#allocation7 + $0x30] sm:$0xff]
    %v80 = vld [vmem:[#allocation7 + $0x38] sm:$0xff]
    %v81 = vld [vmem:[#allocation7 + $0x40] sm:$0xff]
    %v82 = vld [vmem:[#allocation7 + $0x48] sm:$0xff]
    %v83 = vld [vmem:[#allocation7 + $0x50] sm:$0xff]
    %v84 = vld [vmem:[#allocation7 + $0x58] sm:$0xff]
    %v85 = vld [vmem:[#allocation7 + $0x60] sm:$0xff]
    %v86 = vld [vmem:[#allocation7 + $0x68] sm:$0xff]
    %v87 = vld [vmem:[#allocation7 + $0x70] sm:$0xff]
    %v88 = vld [vmem:[#allocation7 + $0x78] sm:$0xff]
    %v89 = vld [vmem:[%s5] sm:$0x1]
    %v90 = vmul.f32 %v57, %v57
    %v91 = vmul.f32 %v58, %v58
    %v92 = vmul.f32 %v59, %v59
    %v93 = vmul.f32 %v60, %v60
    %v94 = vmul.f32 %v61, %v61
    %v95 = vmul.f32 %v62, %v62
    %v96 = vmul.f32 %v63, %v63
    %v97 = vmul.f32 %v64, %v64
    %v98 = vmul.f32 %v65, %v65
    %v99 = vmul.f32 %v66, %v66
    %v100 = vmul.f32 %v67, %v67
    %v101 = vmul.f32 %v68, %v68
    %v102 = vmul.f32 %v69, %v69
    %v103 = vmul.f32 %v70, %v70
    %v104 = vmul.f32 %v71, %v71
    %v105 = vmul.f32 %v72, %v72
    %106 = vadd.xlane.f32.xlu0 %v90
    %v107 = vpop.xlane.xlu0 %106
    %108 = vadd.xlane.f32.xlu0 %v91
    %v109 = vpop.xlane.xlu0 %108
    %110 = vadd.xlane.f32.xlu0 %v92
    %v111 = vpop.xlane.xlu0 %110
    %112 = vadd.xlane.f32.xlu0 %v93
    %v113 = vpop.xlane.xlu0 %112
    %114 = vadd.xlane.f32.xlu0 %v94
    %v115 = vpop.xlane.xlu0 %114
    %116 = vadd.xlane.f32.xlu0 %v95
    %v117 = vpop.xlane.xlu0 %116
    %118 = vadd.xlane.f32.xlu0 %v96
    %v119 = vpop.xlane.xlu0 %118
    %120 = vadd.xlane.f32.xlu0 %v97
    %v121 = vpop.xlane.xlu0 %120
    %122 = vadd.xlane.f32.xlu0 %v98
    %v123 = vpop.xlane.xlu0 %122
    %124 = vadd.xlane.f32.xlu0 %v99
    %v125 = vpop.xlane.xlu0 %124
    %126 = vadd.xlane.f32.xlu0 %v100
    %v127 = vpop.xlane.xlu0 %126
    %128 = vadd.xlane.f32.xlu0 %v101
    %v129 = vpop.xlane.xlu0 %128
    %130 = vadd.xlane.f32.xlu0 %v102
    %v131 = vpop.xlane.xlu0 %130
    %132 = vadd.xlane.f32.xlu0 %v103
    %v133 = vpop.xlane.xlu0 %132
    %134 = vadd.xlane.f32.xlu0 %v104
    %v135 = vpop.xlane.xlu0 %134
    %136 = vadd.xlane.f32.xlu0 %v105
    %v137 = vpop.xlane.xlu0 %136
    %v138 = vmul.f32 %v107, -0.5
    %v139 = vmul.f32 %v109, -0.5
    %v140 = vmul.f32 %v111, -0.5
    %v141 = vmul.f32 %v113, -0.5
    %v142 = vmul.f32 %v115, -0.5
    %v143 = vmul.f32 %v117, -0.5
    %v144 = vmul.f32 %v119, -0.5
    %v145 = vmul.f32 %v121, -0.5
    %v146 = vmul.f32 %v123, -0.5
    %v147 = vmul.f32 %v125, -0.5
    %v148 = vmul.f32 %v127, -0.5
    %v149 = vmul.f32 %v129, -0.5
    %v150 = vmul.f32 %v131, -0.5
    %v151 = vmul.f32 %v133, -0.5
    %v152 = vmul.f32 %v135, -0.5
    %v153 = vmul.f32 %v137, -0.5
    %v154 = vld [vmem:[%s2] sm:$0x1]
    %v155 = vld [vmem:[%s3] sm:$0x1]
    %v157 = vlaneseq
    %v158 = vshrl.u32 %v157, 7
    %v159 = vsub.s32 0, %v158
    %v160 = vrot.slane %v154, %v159
    %v162 = vmul.f32 %v57, %v160
    %v163 = vmul.f32 %v58, %v160
    %v164 = vmul.f32 %v59, %v160
    %v165 = vmul.f32 %v60, %v160
    %v166 = vmul.f32 %v61, %v160
    %v167 = vmul.f32 %v62, %v160
    %v168 = vmul.f32 %v63, %v160
    %v169 = vmul.f32 %v64, %v160
    %v170 = vmul.f32 %v65, %v160
    %v171 = vmul.f32 %v66, %v160
    %v172 = vmul.f32 %v67, %v160
    %v173 = vmul.f32 %v68, %v160
    %v174 = vmul.f32 %v69, %v160
    %v175 = vmul.f32 %v70, %v160
    %v176 = vmul.f32 %v71, %v160
    %v177 = vmul.f32 %v72, %v160
    %v179 = vlaneseq
    %v180 = vshrl.u32 %v179, 7
    %v181 = vsub.s32 0, %v180
    %v182 = vrot.slane %v155, %v181
    %v184 = vadd.f32 %v162, %v182
    %v185 = vadd.f32 %v163, %v182
    %v186 = vadd.f32 %v164, %v182
    %v187 = vadd.f32 %v165, %v182
    %v188 = vadd.f32 %v166, %v182
    %v189 = vadd.f32 %v167, %v182
    %v190 = vadd.f32 %v168, %v182
    %v191 = vadd.f32 %v169, %v182
    %v192 = vadd.f32 %v170, %v182
    %v193 = vadd.f32 %v171, %v182
    %v194 = vadd.f32 %v172, %v182
    %v195 = vadd.f32 %v173, %v182
    %v196 = vadd.f32 %v174, %v182
    %v197 = vadd.f32 %v175, %v182
    %v198 = vadd.f32 %v176, %v182
    %v199 = vadd.f32 %v177, %v182
    %s200 = sld [smem:[#allocation3]]
    %v201 = vstv %s200
    %v202 = vsub.f32 %v138, %v201
    %v203 = vsub.f32 %v139, %v201
    %v204 = vsub.f32 %v140, %v201
    %v205 = vsub.f32 %v141, %v201
    %v206 = vsub.f32 %v142, %v201
    %v207 = vsub.f32 %v143, %v201
    %v208 = vsub.f32 %v144, %v201
    %v209 = vsub.f32 %v145, %v201
    %v210 = vsub.f32 %v146, %v201
    %v211 = vsub.f32 %v147, %v201
    %v212 = vsub.f32 %v148, %v201
    %v213 = vsub.f32 %v149, %v201
    %v214 = vsub.f32 %v150, %v201
    %v215 = vsub.f32 %v151, %v201
    %v216 = vsub.f32 %v152, %v201
    %v217 = vsub.f32 %v153, %v201
    %v218 = vmul.f32 %v184, %v184
    %v219 = vmul.f32 %v185, %v185
    %v220 = vmul.f32 %v186, %v186
    %v221 = vmul.f32 %v187, %v187
    %v222 = vmul.f32 %v188, %v188
    %v223 = vmul.f32 %v189, %v189
    %v224 = vmul.f32 %v190, %v190
    %v225 = vmul.f32 %v191, %v191
    %v226 = vmul.f32 %v192, %v192
    %v227 = vmul.f32 %v193, %v193
    %v228 = vmul.f32 %v194, %v194
    %v229 = vmul.f32 %v195, %v195
    %v230 = vmul.f32 %v196, %v196
    %v231 = vmul.f32 %v197, %v197
    %v232 = vmul.f32 %v198, %v198
    %v233 = vmul.f32 %v199, %v199
    %234 = vadd.xlane.f32.xlu0 %v218
    %v235 = vpop.xlane.xlu0 %234
    %236 = vadd.xlane.f32.xlu0 %v219
    %v237 = vpop.xlane.xlu0 %236
    %238 = vadd.xlane.f32.xlu0 %v220
    %v239 = vpop.xlane.xlu0 %238
    %240 = vadd.xlane.f32.xlu0 %v221
    %v241 = vpop.xlane.xlu0 %240
    %242 = vadd.xlane.f32.xlu0 %v222
    %v243 = vpop.xlane.xlu0 %242
    %244 = vadd.xlane.f32.xlu0 %v223
    %v245 = vpop.xlane.xlu0 %244
    %246 = vadd.xlane.f32.xlu0 %v224
    %v247 = vpop.xlane.xlu0 %246
    %248 = vadd.xlane.f32.xlu0 %v225
    %v249 = vpop.xlane.xlu0 %248
    %250 = vadd.xlane.f32.xlu0 %v226
    %v251 = vpop.xlane.xlu0 %250
    %252 = vadd.xlane.f32.xlu0 %v227
    %v253 = vpop.xlane.xlu0 %252
    %254 = vadd.xlane.f32.xlu0 %v228
    %v255 = vpop.xlane.xlu0 %254
    %256 = vadd.xlane.f32.xlu0 %v229
    %v257 = vpop.xlane.xlu0 %256
    %258 = vadd.xlane.f32.xlu0 %v230
    %v259 = vpop.xlane.xlu0 %258
    %260 = vadd.xlane.f32.xlu0 %v231
    %v261 = vpop.xlane.xlu0 %260
    %262 = vadd.xlane.f32.xlu0 %v232
    %v263 = vpop.xlane.xlu0 %262
    %264 = vadd.xlane.f32.xlu0 %v233
    %v265 = vpop.xlane.xlu0 %264
    %v266 = vmul.f32 %v235, -0.5
    %v267 = vmul.f32 %v237, -0.5
    %v268 = vmul.f32 %v239, -0.5
    %v269 = vmul.f32 %v241, -0.5
    %v270 = vmul.f32 %v243, -0.5
    %v271 = vmul.f32 %v245, -0.5
    %v272 = vmul.f32 %v247, -0.5
    %v273 = vmul.f32 %v249, -0.5
    %v274 = vmul.f32 %v251, -0.5
    %v275 = vmul.f32 %v253, -0.5
    %v276 = vmul.f32 %v255, -0.5
    %v277 = vmul.f32 %v257, -0.5
    %v278 = vmul.f32 %v259, -0.5
    %v279 = vmul.f32 %v261, -0.5
    %v280 = vmul.f32 %v263, -0.5
    %v281 = vmul.f32 %v265, -0.5
    %v282 = vsub.f32 %v266, 117.62413
    %v283 = vsub.f32 %v267, 117.62413
    %v284 = vsub.f32 %v268, 117.62413
    %v285 = vsub.f32 %v269, 117.62413
    %v286 = vsub.f32 %v270, 117.62413
    %v287 = vsub.f32 %v271, 117.62413
    %v288 = vsub.f32 %v272, 117.62413
    %v289 = vsub.f32 %v273, 117.62413
    %v290 = vsub.f32 %v274, 117.62413
    %v291 = vsub.f32 %v275, 117.62413
    %v292 = vsub.f32 %v276, 117.62413
    %v293 = vsub.f32 %v277, 117.62413
    %v294 = vsub.f32 %v278, 117.62413
    %v295 = vsub.f32 %v279, 117.62413
    %v296 = vsub.f32 %v280, 117.62413
    %v297 = vsub.f32 %v281, 117.62413
    %v299 = vlaneseq
    %v300 = vshrl.u32 %v299, 7
    %v301 = vsub.s32 0, %v300
    %v302 = vrot.slane %v89, %v301
    %304 = vmatprep.subr.mxu0 0.0
    %305 = vmatpush1.msra.mxu0 %v88
    %306 = vmatprep.subr.mxu0 0.0
    %307 = vmatpush1.msra.mxu0 %v87
    %308 = vmatprep.subr.mxu0 0.0
    %309 = vmatpush1.msra.mxu0 %v86
    %310 = vmatprep.subr.mxu0 0.0
    %311 = vmatpush1.msra.mxu0 %v85
    %312 = vmatprep.subr.mxu0 0.0
    %313 = vmatpush1.msra.mxu0 %v84
    %314 = vmatprep.subr.mxu0 0.0
    %315 = vmatpush1.msra.mxu0 %v83
    %316 = vmatprep.subr.mxu0 0.0
    %317 = vmatpush1.msra.mxu0 %v82
    %318 = vmatprep.subr.mxu0 0.0
    %319 = vmatpush1.msra.mxu0 %v81
    %320 = vmatprep.subr.mxu0 0.0
    %321 = vmatpush1.msra.mxu0 %v80
    %322 = vmatprep.subr.mxu0 0.0
    %323 = vmatpush1.msra.mxu0 %v79
    %324 = vmatprep.subr.mxu0 0.0
    %325 = vmatpush1.msra.mxu0 %v78
    %326 = vmatprep.subr.mxu0 0.0
    %327 = vmatpush1.msra.mxu0 %v77
    %328 = vmatprep.subr.mxu0 0.0
    %329 = vmatpush1.msra.mxu0 %v76
    %330 = vmatprep.subr.mxu0 0.0
    %331 = vmatpush1.msra.mxu0 %v75
    %332 = vmatprep.subr.mxu0 0.0
    %333 = vmatpush1.msra.mxu0 %v74
    %334 = vmatprep.subr.mxu0 0.0
    %335 = vmatpush1.msra.mxu0 %v73
    %336 = vmatprep.subr.mxu0 0.0
    %337 = vmatpush2.msra.mxu0 0.0
    %338 = vmatprep.subr.mxu0 0.0
    %339 = vmatpush2.msra.mxu0 0.0
    %340 = vmatprep.subr.mxu0 0.0
    %341 = vmatpush2.msra.mxu0 0.0
    %342 = vmatprep.subr.mxu0 0.0
    %343 = vmatpush2.msra.mxu0 0.0
    %344 = vmatprep.subr.mxu0 0.0
    %345 = vmatpush2.msra.mxu0 0.0
    %346 = vmatprep.subr.mxu0 0.0
    %347 = vmatpush2.msra.mxu0 0.0
    %348 = vmatprep.subr.mxu0 0.0
    %349 = vmatpush2.msra.mxu0 0.0
    %350 = vmatprep.subr.mxu0 0.0
    %351 = vmatpush2.msra.mxu0 0.0
    %352 = vmatprep.subr.mxu0 0.0
    %353 = vmatpush2.msra.mxu0 0.0
    %354 = vmatprep.subr.mxu0 0.0
    %355 = vmatpush2.msra.mxu0 0.0
    %356 = vmatprep.subr.mxu0 0.0
    %357 = vmatpush2.msra.mxu0 0.0
    %358 = vmatprep.subr.mxu0 0.0
    %359 = vmatpush2.msra.mxu0 0.0
    %360 = vmatprep.subr.mxu0 0.0
    %361 = vmatpush2.msra.mxu0 0.0
    %362 = vmatprep.subr.mxu0 0.0
    %363 = vmatpush2.msra.mxu0 0.0
    %364 = vmatprep.subr.mxu0 0.0
    %365 = vmatpush2.msra.mxu0 0.0
    %366 = vmatprep.subr.mxu0 0.0
    %367 = vmatpush2.msra.mxu0 0.0
    %368 = vmatprep.mubr.f32.mxu0 0.0
    %369 = vmatmul.mubr.f32.gmra.mxu0 %v184
    %v370 = vpop.f32.mrf.mxu0
    %v371 = vadd.f32 %v302, %v370
    %v372 = vpop.f32.mrf.mxu0
    %373 = vmatprep.mubr.f32.mxu0 0.0
    %374 = vmatmul.mubr.f32.gmra.mxu0 %v185
    %v375 = vpop.f32.mrf.mxu0
    %v376 = vadd.f32 %v302, %v375
    %v377 = vpop.f32.mrf.mxu0
    %378 = vmatprep.mubr.f32.mxu0 0.0
    %379 = vmatmul.mubr.f32.gmra.mxu0 %v186
    %v380 = vpop.f32.mrf.mxu0
    %v381 = vadd.f32 %v302, %v380
    %v382 = vpop.f32.mrf.mxu0
    %383 = vmatprep.mubr.f32.mxu0 0.0
    %384 = vmatmul.mubr.f32.gmra.mxu0 %v187
    %v385 = vpop.f32.mrf.mxu0
    %v386 = vadd.f32 %v302, %v385
    %v387 = vpop.f32.mrf.mxu0
    %388 = vmatprep.mubr.f32.mxu0 0.0
    %389 = vmatmul.mubr.f32.gmra.mxu0 %v188
    %v390 = vpop.f32.mrf.mxu0
    %v391 = vadd.f32 %v302, %v390
    %v392 = vpop.f32.mrf.mxu0
    %393 = vmatprep.mubr.f32.mxu0 0.0
    %394 = vmatmul.mubr.f32.gmra.mxu0 %v189
    %v395 = vpop.f32.mrf.mxu0
    %v396 = vadd.f32 %v302, %v395
    %v397 = vpop.f32.mrf.mxu0
    %398 = vmatprep.mubr.f32.mxu0 0.0
    %399 = vmatmul.mubr.f32.gmra.mxu0 %v190
    %v400 = vpop.f32.mrf.mxu0
    %v401 = vadd.f32 %v302, %v400
    %v402 = vpop.f32.mrf.mxu0
    %403 = vmatprep.mubr.f32.mxu0 0.0
    %404 = vmatmul.mubr.f32.gmra.mxu0 %v191
    %v405 = vpop.f32.mrf.mxu0
    %v406 = vadd.f32 %v302, %v405
    %v407 = vpop.f32.mrf.mxu0
    %408 = vmatprep.mubr.f32.mxu0 0.0
    %409 = vmatmul.mubr.f32.gmra.mxu0 %v192
    %v410 = vpop.f32.mrf.mxu0
    %v411 = vadd.f32 %v302, %v410
    %v412 = vpop.f32.mrf.mxu0
    %413 = vmatprep.mubr.f32.mxu0 0.0
    %414 = vmatmul.mubr.f32.gmra.mxu0 %v193
    %v415 = vpop.f32.mrf.mxu0
    %v416 = vadd.f32 %v302, %v415
    %v417 = vpop.f32.mrf.mxu0
    %418 = vmatprep.mubr.f32.mxu0 0.0
    %419 = vmatmul.mubr.f32.gmra.mxu0 %v194
    %v420 = vpop.f32.mrf.mxu0
    %v421 = vadd.f32 %v302, %v420
    %v422 = vpop.f32.mrf.mxu0
    %423 = vmatprep.mubr.f32.mxu0 0.0
    %424 = vmatmul.mubr.f32.gmra.mxu0 %v195
    %v425 = vpop.f32.mrf.mxu0
    %v426 = vadd.f32 %v302, %v425
    %v427 = vpop.f32.mrf.mxu0
    %428 = vmatprep.mubr.f32.mxu0 0.0
    %429 = vmatmul.mubr.f32.gmra.mxu0 %v196
    %v430 = vpop.f32.mrf.mxu0
    %v431 = vadd.f32 %v302, %v430
    %v432 = vpop.f32.mrf.mxu0
    %433 = vmatprep.mubr.f32.mxu0 0.0
    %434 = vmatmul.mubr.f32.gmra.mxu0 %v197
    %v435 = vpop.f32.mrf.mxu0
    %v436 = vadd.f32 %v302, %v435
    %v437 = vpop.f32.mrf.mxu0
    %438 = vmatprep.mubr.f32.mxu0 0.0
    %439 = vmatmul.mubr.f32.gmra.mxu0 %v198
    %v440 = vpop.f32.mrf.mxu0
    %v441 = vadd.f32 %v302, %v440
    %v442 = vpop.f32.mrf.mxu0
    %443 = vmatprep.mubr.f32.mxu0 0.0
    %444 = vmatmul.mubr.f32.gmra.mxu0 %v199
    %v445 = vpop.f32.mrf.mxu0
    %v446 = vadd.f32 %v302, %v445
    %v447 = vpop.f32.mrf.mxu0
    %448 = vdwg.mxu0
    %v449 = vtanh.pop %v371
    %v450 = vtanh.pop %v376
    %v451 = vtanh.pop %v381
    %v452 = vtanh.pop %v386
    %v453 = vtanh.pop %v391
    %v454 = vtanh.pop %v396
    %v455 = vtanh.pop %v401
    %v456 = vtanh.pop %v406
    %v457 = vtanh.pop %v411
    %v458 = vtanh.pop %v416
    %v459 = vtanh.pop %v421
    %v460 = vtanh.pop %v426
    %v461 = vtanh.pop %v431
    %v462 = vtanh.pop %v436
    %v463 = vtanh.pop %v441
    %v464 = vtanh.pop %v446
    %465 = vst [vmem:[#allocation9] sm:$0xff] %v449
    %466 = vst [vmem:[#allocation9 + $0x8] sm:$0xff] %v450
    %467 = vst [vmem:[#allocation9 + $0x10] sm:$0xff] %v451
    %468 = vst [vmem:[#allocation9 + $0x18] sm:$0xff] %v452
    %469 = vst [vmem:[#allocation9 + $0x20] sm:$0xff] %v453
    %470 = vst [vmem:[#allocation9 + $0x28] sm:$0xff] %v454
    %471 = vst [vmem:[#allocation9 + $0x30] sm:$0xff] %v455
    %472 = vst [vmem:[#allocation9 + $0x38] sm:$0xff] %v456
    %473 = vst [vmem:[#allocation9 + $0x40] sm:$0xff] %v457
    %474 = vst [vmem:[#allocation9 + $0x48] sm:$0xff] %v458
    %475 = vst [vmem:[#allocation9 + $0x50] sm:$0xff] %v459
    %476 = vst [vmem:[#allocation9 + $0x58] sm:$0xff] %v460
    %477 = vst [vmem:[#allocation9 + $0x60] sm:$0xff] %v461
    %478 = vst [vmem:[#allocation9 + $0x68] sm:$0xff] %v462
    %479 = vst [vmem:[#allocation9 + $0x70] sm:$0xff] %v463
    %480 = vst [vmem:[#allocation9 + $0x78] sm:$0xff] %v464
    %v481 = vmul.f32 %v449, %v449
    %v482 = vmul.f32 %v450, %v450
    %v483 = vmul.f32 %v451, %v451
    %v484 = vmul.f32 %v452, %v452
    %v485 = vmul.f32 %v453, %v453
    %v486 = vmul.f32 %v454, %v454
    %v487 = vmul.f32 %v455, %v455
    %v488 = vmul.f32 %v456, %v456
    %v489 = vmul.f32 %v457, %v457
    %v490 = vmul.f32 %v458, %v458
    %v491 = vmul.f32 %v459, %v459
    %v492 = vmul.f32 %v460, %v460
    %v493 = vmul.f32 %v461, %v461
    %v494 = vmul.f32 %v462, %v462
    %v495 = vmul.f32 %v463, %v463
    %v496 = vmul.f32 %v464, %v464
    %497 = vadd.xlane.f32.xlu0 %v481
    %v498 = vpop.xlane.xlu0 %497
    %499 = vadd.xlane.f32.xlu0 %v482
    %v500 = vpop.xlane.xlu0 %499
    %501 = vadd.xlane.f32.xlu0 %v483
    %v502 = vpop.xlane.xlu0 %501
    %503 = vadd.xlane.f32.xlu0 %v484
    %v504 = vpop.xlane.xlu0 %503
    %505 = vadd.xlane.f32.xlu0 %v485
    %v506 = vpop.xlane.xlu0 %505
    %507 = vadd.xlane.f32.xlu0 %v486
    %v508 = vpop.xlane.xlu0 %507
    %509 = vadd.xlane.f32.xlu0 %v487
    %v510 = vpop.xlane.xlu0 %509
    %511 = vadd.xlane.f32.xlu0 %v488
    %v512 = vpop.xlane.xlu0 %511
    %513 = vadd.xlane.f32.xlu0 %v489
    %v514 = vpop.xlane.xlu0 %513
    %515 = vadd.xlane.f32.xlu0 %v490
    %v516 = vpop.xlane.xlu0 %515
    %517 = vadd.xlane.f32.xlu0 %v491
    %v518 = vpop.xlane.xlu0 %517
    %519 = vadd.xlane.f32.xlu0 %v492
    %v520 = vpop.xlane.xlu0 %519
    %521 = vadd.xlane.f32.xlu0 %v493
    %v522 = vpop.xlane.xlu0 %521
    %523 = vadd.xlane.f32.xlu0 %v494
    %v524 = vpop.xlane.xlu0 %523
    %525 = vadd.xlane.f32.xlu0 %v495
    %v526 = vpop.xlane.xlu0 %525
    %527 = vadd.xlane.f32.xlu0 %v496
    %v528 = vpop.xlane.xlu0 %527
    %v529 = vmul.f32 %v498, -0.5
    %v530 = vmul.f32 %v500, -0.5
    %v531 = vmul.f32 %v502, -0.5
    %v532 = vmul.f32 %v504, -0.5
    %v533 = vmul.f32 %v506, -0.5
    %v534 = vmul.f32 %v508, -0.5
    %v535 = vmul.f32 %v510, -0.5
    %v536 = vmul.f32 %v512, -0.5
    %v537 = vmul.f32 %v514, -0.5
    %v538 = vmul.f32 %v516, -0.5
    %v539 = vmul.f32 %v518, -0.5
    %v540 = vmul.f32 %v520, -0.5
    %v541 = vmul.f32 %v522, -0.5
    %v542 = vmul.f32 %v524, -0.5
    %v543 = vmul.f32 %v526, -0.5
    %v544 = vmul.f32 %v528, -0.5
    %v545 = vsub.f32 %v529, 117.62413
    %v546 = vsub.f32 %v530, 117.62413
    %v547 = vsub.f32 %v531, 117.62413
    %v548 = vsub.f32 %v532, 117.62413
    %v549 = vsub.f32 %v533, 117.62413
    %v550 = vsub.f32 %v534, 117.62413
    %v551 = vsub.f32 %v535, 117.62413
    %v552 = vsub.f32 %v536, 117.62413
    %v553 = vsub.f32 %v537, 117.62413
    %v554 = vsub.f32 %v538, 117.62413
    %v555 = vsub.f32 %v539, 117.62413
    %v556 = vsub.f32 %v540, 117.62413
    %v557 = vsub.f32 %v541, 117.62413
    %v558 = vsub.f32 %v542, 117.62413
    %v559 = vsub.f32 %v543, 117.62413
    %v560 = vsub.f32 %v544, 117.62413
    %v561 = vsub.f32 %v202, %v545
    %v562 = vsub.f32 %v203, %v546
    %v563 = vsub.f32 %v204, %v547
    %v564 = vsub.f32 %v205, %v548
    %v565 = vsub.f32 %v206, %v549
    %v566 = vsub.f32 %v207, %v550
    %v567 = vsub.f32 %v208, %v551
    %v568 = vsub.f32 %v209, %v552
    %v569 = vsub.f32 %v210, %v553
    %v570 = vsub.f32 %v211, %v554
    %v571 = vsub.f32 %v212, %v555
    %v572 = vsub.f32 %v213, %v556
    %v573 = vsub.f32 %v214, %v557
    %v574 = vsub.f32 %v215, %v558
    %v575 = vsub.f32 %v216, %v559
    %v576 = vsub.f32 %v217, %v560
    %v593 = vlaneseq
    %v594 = vand.u32 %v593, 127
    %v595 = vlaneseq
    %v596 = vshrl.u32 %v595, 7
    %v597 = vsub.s32 %v594, %v596
    %v598 = vrot.slane %v561, %v597
    %v599 = vadd.s32 %v594, 4294967288
    %v600 = vlaneseq
    %v601 = vshrl.u32 %v600, 7
    %v602 = vsub.s32 %v599, %v601
    %v603 = vrot.slane %v562, %v602
    %vm604 = vcmask 130112
    %v605 = vsel %vm604, %v603, %v598
    %v606 = vadd.s32 %v594, 4294967280
    %v607 = vlaneseq
    %v608 = vshrl.u32 %v607, 7
    %v609 = vsub.s32 %v606, %v608
    %v610 = vrot.slane %v563, %v609
    %vm611 = vcmask 195712
    %v612 = vsel %vm611, %v610, %v605
    %v613 = vadd.s32 %v594, 4294967272
    %v614 = vlaneseq
    %v615 = vshrl.u32 %v614, 7
    %v616 = vsub.s32 %v613, %v615
    %v617 = vrot.slane %v564, %v616
    %vm618 = vcmask 261312
    %v619 = vsel %vm618, %v617, %v612
    %v620 = vadd.s32 %v594, 4294967264
    %v621 = vlaneseq
    %v622 = vshrl.u32 %v621, 7
    %v623 = vsub.s32 %v620, %v622
    %v624 = vrot.slane %v565, %v623
    %vm625 = vcmask 326912
    %v626 = vsel %vm625, %v624, %v619
    %v627 = vadd.s32 %v594, 4294967256
    %v628 = vlaneseq
    %v629 = vshrl.u32 %v628, 7
    %v630 = vsub.s32 %v627, %v629
    %v631 = vrot.slane %v566, %v630
    %vm632 = vcmask 392512
    %v633 = vsel %vm632, %v631, %v626
    %v634 = vadd.s32 %v594, 4294967248
    %v635 = vlaneseq
    %v636 = vshrl.u32 %v635, 7
    %v637 = vsub.s32 %v634, %v636
    %v638 = vrot.slane %v567, %v637
    %vm639 = vcmask 458112
    %v640 = vsel %vm639, %v638, %v633
    %v641 = vadd.s32 %v594, 4294967240
    %v642 = vlaneseq
    %v643 = vshrl.u32 %v642, 7
    %v644 = vsub.s32 %v641, %v643
    %v645 = vrot.slane %v568, %v644
    %vm646 = vcmask 523712
    %v647 = vsel %vm646, %v645, %v640
    %v648 = vadd.s32 %v594, 4294967232
    %v649 = vlaneseq
    %v650 = vshrl.u32 %v649, 7
    %v651 = vsub.s32 %v648, %v650
    %v652 = vrot.slane %v569, %v651
    %vm653 = vcmask 589312
    %v654 = vsel %vm653, %v652, %v647
    %v655 = vadd.s32 %v594, 4294967224
    %v656 = vlaneseq
    %v657 = vshrl.u32 %v656, 7
    %v658 = vsub.s32 %v655, %v657
    %v659 = vrot.slane %v570, %v658
    %vm660 = vcmask 654912
    %v661 = vsel %vm660, %v659, %v654
    %v662 = vadd.s32 %v594, 4294967216
    %v663 = vlaneseq
    %v664 = vshrl.u32 %v663, 7
    %v665 = vsub.s32 %v662, %v664
    %v666 = vrot.slane %v571, %v665
    %vm667 = vcmask 720512
    %v668 = vsel %vm667, %v666, %v661
    %v669 = vadd.s32 %v594, 4294967208
    %v670 = vlaneseq
    %v671 = vshrl.u32 %v670, 7
    %v672 = vsub.s32 %v669, %v671
    %v673 = vrot.slane %v572, %v672
    %vm674 = vcmask 786112
    %v675 = vsel %vm674, %v673, %v668
    %v676 = vadd.s32 %v594, 4294967200
    %v677 = vlaneseq
    %v678 = vshrl.u32 %v677, 7
    %v679 = vsub.s32 %v676, %v678
    %v680 = vrot.slane %v573, %v679
    %vm681 = vcmask 851712
    %v682 = vsel %vm681, %v680, %v675
    %v683 = vadd.s32 %v594, 4294967192
    %v684 = vlaneseq
    %v685 = vshrl.u32 %v684, 7
    %v686 = vsub.s32 %v683, %v685
    %v687 = vrot.slane %v574, %v686
    %vm688 = vcmask 917312
    %v689 = vsel %vm688, %v687, %v682
    %v690 = vadd.s32 %v594, 4294967184
    %v691 = vlaneseq
    %v692 = vshrl.u32 %v691, 7
    %v693 = vsub.s32 %v690, %v692
    %v694 = vrot.slane %v575, %v693
    %vm695 = vcmask 982912
    %v696 = vsel %vm695, %v694, %v689
    %v697 = vadd.s32 %v594, 4294967176
    %v698 = vlaneseq
    %v699 = vshrl.u32 %v698, 7
    %v700 = vsub.s32 %v697, %v699
    %v701 = vrot.slane %v576, %v700
    %vm702 = vcmask 1048512
    %v703 = vsel %vm702, %v701, %v696
    %705 = vst [vmem:[#allocation10] sm:$0x1] %v703
    %v722 = vlaneseq
    %v723 = vshrl.u32 %v722, 7
    %v724 = vsub.s32 %v594, %v723
    %v725 = vrot.slane %v282, %v724
    %v726 = vlaneseq
    %v727 = vshrl.u32 %v726, 7
    %v728 = vsub.s32 %v599, %v727
    %v729 = vrot.slane %v283, %v728
    %v730 = vsel %vm604, %v729, %v725
    %v731 = vlaneseq
    %v732 = vshrl.u32 %v731, 7
    %v733 = vsub.s32 %v606, %v732
    %v734 = vrot.slane %v284, %v733
    %v735 = vsel %vm611, %v734, %v730
    %v736 = vlaneseq
    %v737 = vshrl.u32 %v736, 7
    %v738 = vsub.s32 %v613, %v737
    %v739 = vrot.slane %v285, %v738
    %v740 = vsel %vm618, %v739, %v735
    %v741 = vlaneseq
    %v742 = vshrl.u32 %v741, 7
    %v743 = vsub.s32 %v620, %v742
    %v744 = vrot.slane %v286, %v743
    %v745 = vsel %vm625, %v744, %v740
    %v746 = vlaneseq
    %v747 = vshrl.u32 %v746, 7
    %v748 = vsub.s32 %v627, %v747
    %v749 = vrot.slane %v287, %v748
    %v750 = vsel %vm632, %v749, %v745
    %v751 = vlaneseq
    %v752 = vshrl.u32 %v751, 7
    %v753 = vsub.s32 %v634, %v752
    %v754 = vrot.slane %v288, %v753
    %v755 = vsel %vm639, %v754, %v750
    %v756 = vlaneseq
    %v757 = vshrl.u32 %v756, 7
    %v758 = vsub.s32 %v641, %v757
    %v759 = vrot.slane %v289, %v758
    %v760 = vsel %vm646, %v759, %v755
    %v761 = vlaneseq
    %v762 = vshrl.u32 %v761, 7
    %v763 = vsub.s32 %v648, %v762
    %v764 = vrot.slane %v290, %v763
    %v765 = vsel %vm653, %v764, %v760
    %v766 = vlaneseq
    %v767 = vshrl.u32 %v766, 7
    %v768 = vsub.s32 %v655, %v767
    %v769 = vrot.slane %v291, %v768
    %v770 = vsel %vm660, %v769, %v765
    %v771 = vlaneseq
    %v772 = vshrl.u32 %v771, 7
    %v773 = vsub.s32 %v662, %v772
    %v774 = vrot.slane %v292, %v773
    %v775 = vsel %vm667, %v774, %v770
    %v776 = vlaneseq
    %v777 = vshrl.u32 %v776, 7
    %v778 = vsub.s32 %v669, %v777
    %v779 = vrot.slane %v293, %v778
    %v780 = vsel %vm674, %v779, %v775
    %v781 = vlaneseq
    %v782 = vshrl.u32 %v781, 7
    %v783 = vsub.s32 %v676, %v782
    %v784 = vrot.slane %v294, %v783
    %v785 = vsel %vm681, %v784, %v780
    %v786 = vlaneseq
    %v787 = vshrl.u32 %v786, 7
    %v788 = vsub.s32 %v683, %v787
    %v789 = vrot.slane %v295, %v788
    %v790 = vsel %vm688, %v789, %v785
    %v791 = vlaneseq
    %v792 = vshrl.u32 %v791, 7
    %v793 = vsub.s32 %v690, %v792
    %v794 = vrot.slane %v296, %v793
    %v795 = vsel %vm695, %v794, %v790
    %v796 = vlaneseq
    %v797 = vshrl.u32 %v796, 7
    %v798 = vsub.s32 %v697, %v797
    %v799 = vrot.slane %v297, %v798
    %v800 = vsel %vm702, %v799, %v795
    %s802 = scalar_lea.vmem [#allocation10], 2
    %803 = vst [vmem:[%s802] sm:$0x1] %v800
    %s804 = scalar_lea.vmem %s2, 1
    %v805 = vld [vmem:[%s804] sm:$0x1]
    %s806 = scalar_lea.vmem %s3, 1
    %v807 = vld [vmem:[%s806] sm:$0x1]
    %v809 = vlaneseq
    %v810 = vshrl.u32 %v809, 7
    %v811 = vsub.s32 0, %v810
    %v812 = vrot.slane %v805, %v811
    %v814 = vmul.f32 %v57, %v812
    %v815 = vmul.f32 %v58, %v812
    %v816 = vmul.f32 %v59, %v812
    %v817 = vmul.f32 %v60, %v812
    %v818 = vmul.f32 %v61, %v812
    %v819 = vmul.f32 %v62, %v812
    %v820 = vmul.f32 %v63, %v812
    %v821 = vmul.f32 %v64, %v812
    %v822 = vmul.f32 %v65, %v812
    %v823 = vmul.f32 %v66, %v812
    %v824 = vmul.f32 %v67, %v812
    %v825 = vmul.f32 %v68, %v812
    %v826 = vmul.f32 %v69, %v812
    %v827 = vmul.f32 %v70, %v812
    %v828 = vmul.f32 %v71, %v812
    %v829 = vmul.f32 %v72, %v812
    %v831 = vlaneseq
    %v832 = vshrl.u32 %v831, 7
    %v833 = vsub.s32 0, %v832
    %v834 = vrot.slane %v807, %v833
    %v836 = vadd.f32 %v814, %v834
    %v837 = vadd.f32 %v815, %v834
    %v838 = vadd.f32 %v816, %v834
    %v839 = vadd.f32 %v817, %v834
    %v840 = vadd.f32 %v818, %v834
    %v841 = vadd.f32 %v819, %v834
    %v842 = vadd.f32 %v820, %v834
    %v843 = vadd.f32 %v821, %v834
    %v844 = vadd.f32 %v822, %v834
    %v845 = vadd.f32 %v823, %v834
    %v846 = vadd.f32 %v824, %v834
    %v847 = vadd.f32 %v825, %v834
    %v848 = vadd.f32 %v826, %v834
    %v849 = vadd.f32 %v827, %v834
    %v850 = vadd.f32 %v828, %v834
    %v851 = vadd.f32 %v829, %v834
    %s852 = sld [smem:[#allocation3 + $0x1]]
    %v853 = vstv %s852
    %v854 = vsub.f32 %v138, %v853
    %v855 = vsub.f32 %v139, %v853
    %v856 = vsub.f32 %v140, %v853
    %v857 = vsub.f32 %v141, %v853
    %v858 = vsub.f32 %v142, %v853
    %v859 = vsub.f32 %v143, %v853
    %v860 = vsub.f32 %v144, %v853
    %v861 = vsub.f32 %v145, %v853
    %v862 = vsub.f32 %v146, %v853
    %v863 = vsub.f32 %v147, %v853
    %v864 = vsub.f32 %v148, %v853
    %v865 = vsub.f32 %v149, %v853
    %v866 = vsub.f32 %v150, %v853
    %v867 = vsub.f32 %v151, %v853
    %v868 = vsub.f32 %v152, %v853
    %v869 = vsub.f32 %v153, %v853
    %v870 = vmul.f32 %v836, %v836
    %v871 = vmul.f32 %v837, %v837
    %v872 = vmul.f32 %v838, %v838
    %v873 = vmul.f32 %v839, %v839
    %v874 = vmul.f32 %v840, %v840
    %v875 = vmul.f32 %v841, %v841
    %v876 = vmul.f32 %v842, %v842
    %v877 = vmul.f32 %v843, %v843
    %v878 = vmul.f32 %v844, %v844
    %v879 = vmul.f32 %v845, %v845
    %v880 = vmul.f32 %v846, %v846
    %v881 = vmul.f32 %v847, %v847
    %v882 = vmul.f32 %v848, %v848
    %v883 = vmul.f32 %v849, %v849
    %v884 = vmul.f32 %v850, %v850
    %v885 = vmul.f32 %v851, %v851
    %886 = vadd.xlane.f32.xlu0 %v870
    %v887 = vpop.xlane.xlu0 %886
    %888 = vadd.xlane.f32.xlu0 %v871
    %v889 = vpop.xlane.xlu0 %888
    %890 = vadd.xlane.f32.xlu0 %v872
    %v891 = vpop.xlane.xlu0 %890
    %892 = vadd.xlane.f32.xlu0 %v873
    %v893 = vpop.xlane.xlu0 %892
    %894 = vadd.xlane.f32.xlu0 %v874
    %v895 = vpop.xlane.xlu0 %894
    %896 = vadd.xlane.f32.xlu0 %v875
    %v897 = vpop.xlane.xlu0 %896
    %898 = vadd.xlane.f32.xlu0 %v876
    %v899 = vpop.xlane.xlu0 %898
    %900 = vadd.xlane.f32.xlu0 %v877
    %v901 = vpop.xlane.xlu0 %900
    %902 = vadd.xlane.f32.xlu0 %v878
    %v903 = vpop.xlane.xlu0 %902
    %904 = vadd.xlane.f32.xlu0 %v879
    %v905 = vpop.xlane.xlu0 %904
    %906 = vadd.xlane.f32.xlu0 %v880
    %v907 = vpop.xlane.xlu0 %906
    %908 = vadd.xlane.f32.xlu0 %v881
    %v909 = vpop.xlane.xlu0 %908
    %910 = vadd.xlane.f32.xlu0 %v882
    %v911 = vpop.xlane.xlu0 %910
    %912 = vadd.xlane.f32.xlu0 %v883
    %v913 = vpop.xlane.xlu0 %912
    %914 = vadd.xlane.f32.xlu0 %v884
    %v915 = vpop.xlane.xlu0 %914
    %916 = vadd.xlane.f32.xlu0 %v885
    %v917 = vpop.xlane.xlu0 %916
    %v918 = vmul.f32 %v887, -0.5
    %v919 = vmul.f32 %v889, -0.5
    %v920 = vmul.f32 %v891, -0.5
    %v921 = vmul.f32 %v893, -0.5
    %v922 = vmul.f32 %v895, -0.5
    %v923 = vmul.f32 %v897, -0.5
    %v924 = vmul.f32 %v899, -0.5
    %v925 = vmul.f32 %v901, -0.5
    %v926 = vmul.f32 %v903, -0.5
    %v927 = vmul.f32 %v905, -0.5
    %v928 = vmul.f32 %v907, -0.5
    %v929 = vmul.f32 %v909, -0.5
    %v930 = vmul.f32 %v911, -0.5
    %v931 = vmul.f32 %v913, -0.5
    %v932 = vmul.f32 %v915, -0.5
    %v933 = vmul.f32 %v917, -0.5
    %v934 = vsub.f32 %v918, 117.62413
    %v935 = vsub.f32 %v919, 117.62413
    %v936 = vsub.f32 %v920, 117.62413
    %v937 = vsub.f32 %v921, 117.62413
    %v938 = vsub.f32 %v922, 117.62413
    %v939 = vsub.f32 %v923, 117.62413
    %v940 = vsub.f32 %v924, 117.62413
    %v941 = vsub.f32 %v925, 117.62413
    %v942 = vsub.f32 %v926, 117.62413
    %v943 = vsub.f32 %v927, 117.62413
    %v944 = vsub.f32 %v928, 117.62413
    %v945 = vsub.f32 %v929, 117.62413
    %v946 = vsub.f32 %v930, 117.62413
    %v947 = vsub.f32 %v931, 117.62413
    %v948 = vsub.f32 %v932, 117.62413
    %v949 = vsub.f32 %v933, 117.62413
    %950 = vmatprep.subr.mxu0 0.0
    %951 = vmatpush1.msra.mxu0 %v88
    %952 = vmatprep.subr.mxu0 0.0
    %953 = vmatpush1.msra.mxu0 %v87
    %954 = vmatprep.subr.mxu0 0.0
    %955 = vmatpush1.msra.mxu0 %v86
    %956 = vmatprep.subr.mxu0 0.0
    %957 = vmatpush1.msra.mxu0 %v85
    %958 = vmatprep.subr.mxu0 0.0
    %959 = vmatpush1.msra.mxu0 %v84
    %960 = vmatprep.subr.mxu0 0.0
    %961 = vmatpush1.msra.mxu0 %v83
    %962 = vmatprep.subr.mxu0 0.0
    %963 = vmatpush1.msra.mxu0 %v82
    %964 = vmatprep.subr.mxu0 0.0
    %965 = vmatpush1.msra.mxu0 %v81
    %966 = vmatprep.subr.mxu0 0.0
    %967 = vmatpush1.msra.mxu0 %v80
    %968 = vmatprep.subr.mxu0 0.0
    %969 = vmatpush1.msra.mxu0 %v79
    %970 = vmatprep.subr.mxu0 0.0
    %971 = vmatpush1.msra.mxu0 %v78
    %972 = vmatprep.subr.mxu0 0.0
    %973 = vmatpush1.msra.mxu0 %v77
    %974 = vmatprep.subr.mxu0 0.0
    %975 = vmatpush1.msra.mxu0 %v76
    %976 = vmatprep.subr.mxu0 0.0
    %977 = vmatpush1.msra.mxu0 %v75
    %978 = vmatprep.subr.mxu0 0.0
    %979 = vmatpush1.msra.mxu0 %v74
    %980 = vmatprep.subr.mxu0 0.0
    %981 = vmatpush1.msra.mxu0 %v73
    %982 = vmatprep.subr.mxu0 0.0
    %983 = vmatpush2.msra.mxu0 0.0
    %984 = vmatprep.subr.mxu0 0.0
    %985 = vmatpush2.msra.mxu0 0.0
    %986 = vmatprep.subr.mxu0 0.0
    %987 = vmatpush2.msra.mxu0 0.0
    %988 = vmatprep.subr.mxu0 0.0
    %989 = vmatpush2.msra.mxu0 0.0
    %990 = vmatprep.subr.mxu0 0.0
    %991 = vmatpush2.msra.mxu0 0.0
    %992 = vmatprep.subr.mxu0 0.0
    %993 = vmatpush2.msra.mxu0 0.0
    %994 = vmatprep.subr.mxu0 0.0
    %995 = vmatpush2.msra.mxu0 0.0
    %996 = vmatprep.subr.mxu0 0.0
    %997 = vmatpush2.msra.mxu0 0.0
    %998 = vmatprep.subr.mxu0 0.0
    %999 = vmatpush2.msra.mxu0 0.0
    %1000 = vmatprep.subr.mxu0 0.0
    %1001 = vmatpush2.msra.mxu0 0.0
    %1002 = vmatprep.subr.mxu0 0.0
    %1003 = vmatpush2.msra.mxu0 0.0
    %1004 = vmatprep.subr.mxu0 0.0
    %1005 = vmatpush2.msra.mxu0 0.0
    %1006 = vmatprep.subr.mxu0 0.0
    %1007 = vmatpush2.msra.mxu0 0.0
    %1008 = vmatprep.subr.mxu0 0.0
    %1009 = vmatpush2.msra.mxu0 0.0
    %1010 = vmatprep.subr.mxu0 0.0
    %1011 = vmatpush2.msra.mxu0 0.0
    %1012 = vmatprep.subr.mxu0 0.0
    %1013 = vmatpush2.msra.mxu0 0.0
    %1014 = vmatprep.mubr.f32.mxu0 0.0
    %1015 = vmatmul.mubr.f32.gmra.mxu0 %v836
    %v1016 = vpop.f32.mrf.mxu0
    %v1017 = vadd.f32 %v302, %v1016
    %v1018 = vpop.f32.mrf.mxu0
    %1019 = vmatprep.mubr.f32.mxu0 0.0
    %1020 = vmatmul.mubr.f32.gmra.mxu0 %v837
    %v1021 = vpop.f32.mrf.mxu0
    %v1022 = vadd.f32 %v302, %v1021
    %v1023 = vpop.f32.mrf.mxu0
    %1024 = vmatprep.mubr.f32.mxu0 0.0
    %1025 = vmatmul.mubr.f32.gmra.mxu0 %v838
    %v1026 = vpop.f32.mrf.mxu0
    %v1027 = vadd.f32 %v302, %v1026
    %v1028 = vpop.f32.mrf.mxu0
    %1029 = vmatprep.mubr.f32.mxu0 0.0
    %1030 = vmatmul.mubr.f32.gmra.mxu0 %v839
    %v1031 = vpop.f32.mrf.mxu0
    %v1032 = vadd.f32 %v302, %v1031
    %v1033 = vpop.f32.mrf.mxu0
    %1034 = vmatprep.mubr.f32.mxu0 0.0
    %1035 = vmatmul.mubr.f32.gmra.mxu0 %v840
    %v1036 = vpop.f32.mrf.mxu0
    %v1037 = vadd.f32 %v302, %v1036
    %v1038 = vpop.f32.mrf.mxu0
    %1039 = vmatprep.mubr.f32.mxu0 0.0
    %1040 = vmatmul.mubr.f32.gmra.mxu0 %v841
    %v1041 = vpop.f32.mrf.mxu0
    %v1042 = vadd.f32 %v302, %v1041
    %v1043 = vpop.f32.mrf.mxu0
    %1044 = vmatprep.mubr.f32.mxu0 0.0
    %1045 = vmatmul.mubr.f32.gmra.mxu0 %v842
    %v1046 = vpop.f32.mrf.mxu0
    %v1047 = vadd.f32 %v302, %v1046
    %v1048 = vpop.f32.mrf.mxu0
    %1049 = vmatprep.mubr.f32.mxu0 0.0
    %1050 = vmatmul.mubr.f32.gmra.mxu0 %v843
    %v1051 = vpop.f32.mrf.mxu0
    %v1052 = vadd.f32 %v302, %v1051
    %v1053 = vpop.f32.mrf.mxu0
    %1054 = vmatprep.mubr.f32.mxu0 0.0
    %1055 = vmatmul.mubr.f32.gmra.mxu0 %v844
    %v1056 = vpop.f32.mrf.mxu0
    %v1057 = vadd.f32 %v302, %v1056
    %v1058 = vpop.f32.mrf.mxu0
    %1059 = vmatprep.mubr.f32.mxu0 0.0
    %1060 = vmatmul.mubr.f32.gmra.mxu0 %v845
    %v1061 = vpop.f32.mrf.mxu0
    %v1062 = vadd.f32 %v302, %v1061
    %v1063 = vpop.f32.mrf.mxu0
    %1064 = vmatprep.mubr.f32.mxu0 0.0
    %1065 = vmatmul.mubr.f32.gmra.mxu0 %v846
    %v1066 = vpop.f32.mrf.mxu0
    %v1067 = vadd.f32 %v302, %v1066
    %v1068 = vpop.f32.mrf.mxu0
    %1069 = vmatprep.mubr.f32.mxu0 0.0
    %1070 = vmatmul.mubr.f32.gmra.mxu0 %v847
    %v1071 = vpop.f32.mrf.mxu0
    %v1072 = vadd.f32 %v302, %v1071
    %v1073 = vpop.f32.mrf.mxu0
    %1074 = vmatprep.mubr.f32.mxu0 0.0
    %1075 = vmatmul.mubr.f32.gmra.mxu0 %v848
    %v1076 = vpop.f32.mrf.mxu0
    %v1077 = vadd.f32 %v302, %v1076
    %v1078 = vpop.f32.mrf.mxu0
    %1079 = vmatprep.mubr.f32.mxu0 0.0
    %1080 = vmatmul.mubr.f32.gmra.mxu0 %v849
    %v1081 = vpop.f32.mrf.mxu0
    %v1082 = vadd.f32 %v302, %v1081
    %v1083 = vpop.f32.mrf.mxu0
    %1084 = vmatprep.mubr.f32.mxu0 0.0
    %1085 = vmatmul.mubr.f32.gmra.mxu0 %v850
    %v1086 = vpop.f32.mrf.mxu0
    %v1087 = vadd.f32 %v302, %v1086
    %v1088 = vpop.f32.mrf.mxu0
    %1089 = vmatprep.mubr.f32.mxu0 0.0
    %1090 = vmatmul.mubr.f32.gmra.mxu0 %v851
    %v1091 = vpop.f32.mrf.mxu0
    %v1092 = vadd.f32 %v302, %v1091
    %v1093 = vpop.f32.mrf.mxu0
    %1094 = vdwg.mxu0
    %v1095 = vtanh.pop %v1017
    %v1096 = vtanh.pop %v1022
    %v1097 = vtanh.pop %v1027
    %v1098 = vtanh.pop %v1032
    %v1099 = vtanh.pop %v1037
    %v1100 = vtanh.pop %v1042
    %v1101 = vtanh.pop %v1047
    %v1102 = vtanh.pop %v1052
    %v1103 = vtanh.pop %v1057
    %v1104 = vtanh.pop %v1062
    %v1105 = vtanh.pop %v1067
    %v1106 = vtanh.pop %v1072
    %v1107 = vtanh.pop %v1077
    %v1108 = vtanh.pop %v1082
    %v1109 = vtanh.pop %v1087
    %v1110 = vtanh.pop %v1092
    %s1111 = scalar_lea.vmem [#allocation9], 128
    %1112 = vst [vmem:[%s1111] sm:$0xff] %v1095
    %1113 = vst [vmem:[%s1111 + $0x8] sm:$0xff] %v1096
    %1114 = vst [vmem:[%s1111 + $0x10] sm:$0xff] %v1097
    %1115 = vst [vmem:[%s1111 + $0x18] sm:$0xff] %v1098
    %1116 = vst [vmem:[%s1111 + $0x20] sm:$0xff] %v1099
    %1117 = vst [vmem:[%s1111 + $0x28] sm:$0xff] %v1100
    %1118 = vst [vmem:[%s1111 + $0x30] sm:$0xff] %v1101
    %1119 = vst [vmem:[%s1111 + $0x38] sm:$0xff] %v1102
    %1120 = vst [vmem:[%s1111 + $0x40] sm:$0xff] %v1103
    %1121 = vst [vmem:[%s1111 + $0x48] sm:$0xff] %v1104
    %1122 = vst [vmem:[%s1111 + $0x50] sm:$0xff] %v1105
    %1123 = vst [vmem:[%s1111 + $0x58] sm:$0xff] %v1106
    %1124 = vst [vmem:[%s1111 + $0x60] sm:$0xff] %v1107
    %1125 = vst [vmem:[%s1111 + $0x68] sm:$0xff] %v1108
    %1126 = vst [vmem:[%s1111 + $0x70] sm:$0xff] %v1109
    %1127 = vst [vmem:[%s1111 + $0x78] sm:$0xff] %v1110
    %v1128 = vmul.f32 %v1095, %v1095
    %v1129 = vmul.f32 %v1096, %v1096
    %v1130 = vmul.f32 %v1097, %v1097
    %v1131 = vmul.f32 %v1098, %v1098
    %v1132 = vmul.f32 %v1099, %v1099
    %v1133 = vmul.f32 %v1100, %v1100
    %v1134 = vmul.f32 %v1101, %v1101
    %v1135 = vmul.f32 %v1102, %v1102
    %v1136 = vmul.f32 %v1103, %v1103
    %v1137 = vmul.f32 %v1104, %v1104
    %v1138 = vmul.f32 %v1105, %v1105
    %v1139 = vmul.f32 %v1106, %v1106
    %v1140 = vmul.f32 %v1107, %v1107
    %v1141 = vmul.f32 %v1108, %v1108
    %v1142 = vmul.f32 %v1109, %v1109
    %v1143 = vmul.f32 %v1110, %v1110
    %1144 = vadd.xlane.f32.xlu0 %v1128
    %v1145 = vpop.xlane.xlu0 %1144
    %1146 = vadd.xlane.f32.xlu0 %v1129
    %v1147 = vpop.xlane.xlu0 %1146
    %1148 = vadd.xlane.f32.xlu0 %v1130
    %v1149 = vpop.xlane.xlu0 %1148
    %1150 = vadd.xlane.f32.xlu0 %v1131
    %v1151 = vpop.xlane.xlu0 %1150
    %1152 = vadd.xlane.f32.xlu0 %v1132
    %v1153 = vpop.xlane.xlu0 %1152
    %1154 = vadd.xlane.f32.xlu0 %v1133
    %v1155 = vpop.xlane.xlu0 %1154
    %1156 = vadd.xlane.f32.xlu0 %v1134
    %v1157 = vpop.xlane.xlu0 %1156
    %1158 = vadd.xlane.f32.xlu0 %v1135
    %v1159 = vpop.xlane.xlu0 %1158
    %1160 = vadd.xlane.f32.xlu0 %v1136
    %v1161 = vpop.xlane.xlu0 %1160
    %1162 = vadd.xlane.f32.xlu0 %v1137
    %v1163 = vpop.xlane.xlu0 %1162
    %1164 = vadd.xlane.f32.xlu0 %v1138
    %v1165 = vpop.xlane.xlu0 %1164
    %1166 = vadd.xlane.f32.xlu0 %v1139
    %v1167 = vpop.xlane.xlu0 %1166
    %1168 = vadd.xlane.f32.xlu0 %v1140
    %v1169 = vpop.xlane.xlu0 %1168
    %1170 = vadd.xlane.f32.xlu0 %v1141
    %v1171 = vpop.xlane.xlu0 %1170
    %1172 = vadd.xlane.f32.xlu0 %v1142
    %v1173 = vpop.xlane.xlu0 %1172
    %1174 = vadd.xlane.f32.xlu0 %v1143
    %v1175 = vpop.xlane.xlu0 %1174
    %v1176 = vmul.f32 %v1145, -0.5
    %v1177 = vmul.f32 %v1147, -0.5
    %v1178 = vmul.f32 %v1149, -0.5
    %v1179 = vmul.f32 %v1151, -0.5
    %v1180 = vmul.f32 %v1153, -0.5
    %v1181 = vmul.f32 %v1155, -0.5
    %v1182 = vmul.f32 %v1157, -0.5
    %v1183 = vmul.f32 %v1159, -0.5
    %v1184 = vmul.f32 %v1161, -0.5
    %v1185 = vmul.f32 %v1163, -0.5
    %v1186 = vmul.f32 %v1165, -0.5
    %v1187 = vmul.f32 %v1167, -0.5
    %v1188 = vmul.f32 %v1169, -0.5
    %v1189 = vmul.f32 %v1171, -0.5
    %v1190 = vmul.f32 %v1173, -0.5
    %v1191 = vmul.f32 %v1175, -0.5
    %v1192 = vsub.f32 %v1176, 117.62413
    %v1193 = vsub.f32 %v1177, 117.62413
    %v1194 = vsub.f32 %v1178, 117.62413
    %v1195 = vsub.f32 %v1179, 117.62413
    %v1196 = vsub.f32 %v1180, 117.62413
    %v1197 = vsub.f32 %v1181, 117.62413
    %v1198 = vsub.f32 %v1182, 117.62413
    %v1199 = vsub.f32 %v1183, 117.62413
    %v1200 = vsub.f32 %v1184, 117.62413
    %v1201 = vsub.f32 %v1185, 117.62413
    %v1202 = vsub.f32 %v1186, 117.62413
    %v1203 = vsub.f32 %v1187, 117.62413
    %v1204 = vsub.f32 %v1188, 117.62413
    %v1205 = vsub.f32 %v1189, 117.62413
    %v1206 = vsub.f32 %v1190, 117.62413
    %v1207 = vsub.f32 %v1191, 117.62413
    %v1208 = vsub.f32 %v854, %v1192
    %v1209 = vsub.f32 %v855, %v1193
    %v1210 = vsub.f32 %v856, %v1194
    %v1211 = vsub.f32 %v857, %v1195
    %v1212 = vsub.f32 %v858, %v1196
    %v1213 = vsub.f32 %v859, %v1197
    %v1214 = vsub.f32 %v860, %v1198
    %v1215 = vsub.f32 %v861, %v1199
    %v1216 = vsub.f32 %v862, %v1200
    %v1217 = vsub.f32 %v863, %v1201
    %v1218 = vsub.f32 %v864, %v1202
    %v1219 = vsub.f32 %v865, %v1203
    %v1220 = vsub.f32 %v866, %v1204
    %v1221 = vsub.f32 %v867, %v1205
    %v1222 = vsub.f32 %v868, %v1206
    %v1223 = vsub.f32 %v869, %v1207
    %v1240 = vlaneseq
    %v1241 = vshrl.u32 %v1240, 7
    %v1242 = vsub.s32 %v594, %v1241
    %v1243 = vrot.slane %v1208, %v1242
    %v1244 = vlaneseq
    %v1245 = vshrl.u32 %v1244, 7
    %v1246 = vsub.s32 %v599, %v1245
    %v1247 = vrot.slane %v1209, %v1246
    %v1248 = vsel %vm604, %v1247, %v1243
    %v1249 = vlaneseq
    %v1250 = vshrl.u32 %v1249, 7
    %v1251 = vsub.s32 %v606, %v1250
    %v1252 = vrot.slane %v1210, %v1251
    %v1253 = vsel %vm611, %v1252, %v1248
    %v1254 = vlaneseq
    %v1255 = vshrl.u32 %v1254, 7
    %v1256 = vsub.s32 %v613, %v1255
    %v1257 = vrot.slane %v1211, %v1256
    %v1258 = vsel %vm618, %v1257, %v1253
    %v1259 = vlaneseq
    %v1260 = vshrl.u32 %v1259, 7
    %v1261 = vsub.s32 %v620, %v1260
    %v1262 = vrot.slane %v1212, %v1261
    %v1263 = vsel %vm625, %v1262, %v1258
    %v1264 = vlaneseq
    %v1265 = vshrl.u32 %v1264, 7
    %v1266 = vsub.s32 %v627, %v1265
    %v1267 = vrot.slane %v1213, %v1266
    %v1268 = vsel %vm632, %v1267, %v1263
    %v1269 = vlaneseq
    %v1270 = vshrl.u32 %v1269, 7
    %v1271 = vsub.s32 %v634, %v1270
    %v1272 = vrot.slane %v1214, %v1271
    %v1273 = vsel %vm639, %v1272, %v1268
    %v1274 = vlaneseq
    %v1275 = vshrl.u32 %v1274, 7
    %v1276 = vsub.s32 %v641, %v1275
    %v1277 = vrot.slane %v1215, %v1276
    %v1278 = vsel %vm646, %v1277, %v1273
    %v1279 = vlaneseq
    %v1280 = vshrl.u32 %v1279, 7
    %v1281 = vsub.s32 %v648, %v1280
    %v1282 = vrot.slane %v1216, %v1281
    %v1283 = vsel %vm653, %v1282, %v1278
    %v1284 = vlaneseq
    %v1285 = vshrl.u32 %v1284, 7
    %v1286 = vsub.s32 %v655, %v1285
    %v1287 = vrot.slane %v1217, %v1286
    %v1288 = vsel %vm660, %v1287, %v1283
    %v1289 = vlaneseq
    %v1290 = vshrl.u32 %v1289, 7
    %v1291 = vsub.s32 %v662, %v1290
    %v1292 = vrot.slane %v1218, %v1291
    %v1293 = vsel %vm667, %v1292, %v1288
    %v1294 = vlaneseq
    %v1295 = vshrl.u32 %v1294, 7
    %v1296 = vsub.s32 %v669, %v1295
    %v1297 = vrot.slane %v1219, %v1296
    %v1298 = vsel %vm674, %v1297, %v1293
    %v1299 = vlaneseq
    %v1300 = vshrl.u32 %v1299, 7
    %v1301 = vsub.s32 %v676, %v1300
    %v1302 = vrot.slane %v1220, %v1301
    %v1303 = vsel %vm681, %v1302, %v1298
    %v1304 = vlaneseq
    %v1305 = vshrl.u32 %v1304, 7
    %v1306 = vsub.s32 %v683, %v1305
    %v1307 = vrot.slane %v1221, %v1306
    %v1308 = vsel %vm688, %v1307, %v1303
    %v1309 = vlaneseq
    %v1310 = vshrl.u32 %v1309, 7
    %v1311 = vsub.s32 %v690, %v1310
    %v1312 = vrot.slane %v1222, %v1311
    %v1313 = vsel %vm695, %v1312, %v1308
    %v1314 = vlaneseq
    %v1315 = vshrl.u32 %v1314, 7
    %v1316 = vsub.s32 %v697, %v1315
    %v1317 = vrot.slane %v1223, %v1316
    %v1318 = vsel %vm702, %v1317, %v1313
    %1320 = vst [vmem:[#allocation10 + $0x1] sm:$0x1] %v1318
    %v1337 = vlaneseq
    %v1338 = vshrl.u32 %v1337, 7
    %v1339 = vsub.s32 %v594, %v1338
    %v1340 = vrot.slane %v934, %v1339
    %v1341 = vlaneseq
    %v1342 = vshrl.u32 %v1341, 7
    %v1343 = vsub.s32 %v599, %v1342
    %v1344 = vrot.slane %v935, %v1343
    %v1345 = vsel %vm604, %v1344, %v1340
    %v1346 = vlaneseq
    %v1347 = vshrl.u32 %v1346, 7
    %v1348 = vsub.s32 %v606, %v1347
    %v1349 = vrot.slane %v936, %v1348
    %v1350 = vsel %vm611, %v1349, %v1345
    %v1351 = vlaneseq
    %v1352 = vshrl.u32 %v1351, 7
    %v1353 = vsub.s32 %v613, %v1352
    %v1354 = vrot.slane %v937, %v1353
    %v1355 = vsel %vm618, %v1354, %v1350
    %v1356 = vlaneseq
    %v1357 = vshrl.u32 %v1356, 7
    %v1358 = vsub.s32 %v620, %v1357
    %v1359 = vrot.slane %v938, %v1358
    %v1360 = vsel %vm625, %v1359, %v1355
    %v1361 = vlaneseq
    %v1362 = vshrl.u32 %v1361, 7
    %v1363 = vsub.s32 %v627, %v1362
    %v1364 = vrot.slane %v939, %v1363
    %v1365 = vsel %vm632, %v1364, %v1360
    %v1366 = vlaneseq
    %v1367 = vshrl.u32 %v1366, 7
    %v1368 = vsub.s32 %v634, %v1367
    %v1369 = vrot.slane %v940, %v1368
    %v1370 = vsel %vm639, %v1369, %v1365
    %v1371 = vlaneseq
    %v1372 = vshrl.u32 %v1371, 7
    %v1373 = vsub.s32 %v641, %v1372
    %v1374 = vrot.slane %v941, %v1373
    %v1375 = vsel %vm646, %v1374, %v1370
    %v1376 = vlaneseq
    %v1377 = vshrl.u32 %v1376, 7
    %v1378 = vsub.s32 %v648, %v1377
    %v1379 = vrot.slane %v942, %v1378
    %v1380 = vsel %vm653, %v1379, %v1375
    %v1381 = vlaneseq
    %v1382 = vshrl.u32 %v1381, 7
    %v1383 = vsub.s32 %v655, %v1382
    %v1384 = vrot.slane %v943, %v1383
    %v1385 = vsel %vm660, %v1384, %v1380
    %v1386 = vlaneseq
    %v1387 = vshrl.u32 %v1386, 7
    %v1388 = vsub.s32 %v662, %v1387
    %v1389 = vrot.slane %v944, %v1388
    %v1390 = vsel %vm667, %v1389, %v1385
    %v1391 = vlaneseq
    %v1392 = vshrl.u32 %v1391, 7
    %v1393 = vsub.s32 %v669, %v1392
    %v1394 = vrot.slane %v945, %v1393
    %v1395 = vsel %vm674, %v1394, %v1390
    %v1396 = vlaneseq
    %v1397 = vshrl.u32 %v1396, 7
    %v1398 = vsub.s32 %v676, %v1397
    %v1399 = vrot.slane %v946, %v1398
    %v1400 = vsel %vm681, %v1399, %v1395
    %v1401 = vlaneseq
    %v1402 = vshrl.u32 %v1401, 7
    %v1403 = vsub.s32 %v683, %v1402
    %v1404 = vrot.slane %v947, %v1403
    %v1405 = vsel %vm688, %v1404, %v1400
    %v1406 = vlaneseq
    %v1407 = vshrl.u32 %v1406, 7
    %v1408 = vsub.s32 %v690, %v1407
    %v1409 = vrot.slane %v948, %v1408
    %v1410 = vsel %vm695, %v1409, %v1405
    %v1411 = vlaneseq
    %v1412 = vshrl.u32 %v1411, 7
    %v1413 = vsub.s32 %v697, %v1412
    %v1414 = vrot.slane %v949, %v1413
    %v1415 = vsel %vm702, %v1414, %v1410
    %1417 = vst [vmem:[%s802 + $0x1] sm:$0x1] %v1415
    // Predicated region
    $region30: #{tpu_custom_call.1} parent=1 // pred_check
      _
    $region31: #{tpu_custom_call.1} parent=1 // pred_check_branch
      %1419 = sbr.rel (0) target = $region33
    $region32: #{tpu_custom_call.1} parent=1 // pred_region
      %s1421 = ssub.s32 4096, 4096
      %1422 = vsyncadd [#allocation6], %s1421
      %s1423 = sshll.u32 [#allocation9], 4
      %s1424 = int_to_ptr.vmem [resolvable:$true] %s1423
      %1429 = dma.vmem_to_hbm [thread:$0]  %s1424, 4096, %s6, [#allocation6], 128, 128, 8
    $region33: #{tpu_custom_call.1} parent=1 // pred_fallthru
      _
    // Predicated region
    $region34: #{tpu_custom_call.1} parent=1 // pred_check
      _
    $region35: #{tpu_custom_call.1} parent=1 // pred_check_branch
      %1431 = sbr.rel (0) target = $region37
    $region36: #{tpu_custom_call.1} parent=1 // pred_region
      %s1433 = ssub.s32 64, 64
      %1434 = vsyncadd [#allocation11], %s1433
      %s1435 = sshll.u32 [#allocation10], 4
      %s1436 = int_to_ptr.vmem [resolvable:$true] %s1435
      %1441 = dma.vmem_to_hbm [thread:$0]  %s1436, 64, %s7, [#allocation11], 32, 32, 2
    $region37: #{tpu_custom_call.1} parent=1 // pred_fallthru
      _
    // Predicated region
    $region38: #{tpu_custom_call.1} parent=1 // pred_check
      _
    $region39: #{tpu_custom_call.1} parent=1 // pred_check_branch
      %1443 = sbr.rel (0) target = $region41
    $region40: #{tpu_custom_call.1} parent=1 // pred_region
      %1444 = dma.done [#allocation6], 4096
    $region41: #{tpu_custom_call.1} parent=1 // pred_fallthru
      _
    // Predicated region
    $region42: #{tpu_custom_call.1} parent=1 // pred_check
      _
    $region43: #{tpu_custom_call.1} parent=1 // pred_check_branch
      %1446 = sbr.rel (0) target = $region45
    $region44: #{tpu_custom_call.1} parent=1 // pred_region
      %1447 = dma.done [#allocation11], 64
    $region45: #{tpu_custom_call.1} parent=1 // pred_fallthru
      _
    %1448 = vsyncpa [#allocation5], 1
    %1449 = vsyncpa [#allocation8], 1
    %1450 = vsyncpa [#allocation6], 1
    %1451 = vsyncpa [#allocation11], 1

</llo_original>
